<compile_context>
chip_gen: v7x
topology: tpu7x:2x2x1
jax: 0.10.0
libtpu: 0.0.40
codegen_flags: <defaults>
</compile_context>

<pallas_src>
import jax
import jax.numpy as jnp
from jax.experimental import pallas as pl
from jax.experimental.pallas import tpu as pltpu


def pre_classical_kernel(x_ref, w_ref, b_ref, out_ref):
    # Linear(784 -> n_qubits): f32 in, f32 MXU accumulation, f32 bias + tanh.
    h = jnp.dot(
        x_ref[...],
        w_ref[...],
        preferred_element_type=jnp.float32,
        precision=jax.lax.Precision.HIGHEST,
    )
    out_ref[...] = jnp.tanh(h + b_ref[...]).astype(out_ref.dtype)


def _round_up(a, m):
    return ((a + m - 1) // m) * m


def pre_classical_forward(x, w1, b1, *, tb_max=4096):
    """x: (B, 1, 28, 28) float32.  w1: (784, n_qubits).  b1: (n_qubits,).

    Returns (B, n_qubits) float32 = tanh(flatten(x) @ w1 + b1).
    """
    B = x.shape[0]
    in_features, n_qubits = w1.shape

    xf = x.reshape(B, -1)  # nn.Flatten (row-major, same as PyTorch)
    assert xf.shape[1] == in_features
    xf = xf.astype(jnp.float32)
    w1f = w1.astype(jnp.float32)
    b1r = b1.reshape(1, n_qubits).astype(jnp.float32)

    # Batch tile selection:
    #  - tiny batches: single full-extent block (block dim == array dim is
    #    always legal, even if not a multiple of 8),
    #  - otherwise: at least 2 tiles (so v7x megacore splits the work), each
    #    a multiple of 8 sublanes, capped at tb_max.  Ragged last tile is
    #    handled by Pallas masking (no padding, no output slice copy).
    if B <= 16:
        TB = B
    else:
        TB = min(tb_max, _round_up(pl.cdiv(B, 2), 8))
    grid = (pl.cdiv(B, TB),)

    # Explicit scoped-VMEM budget: double-buffered x tile + double-buffered
    # out tile + resident weight/bias (lane dims pad to 128, sublanes to 8).
    in_lanes = _round_up(in_features, 128)
    out_lanes = _round_up(n_qubits, 128)
    vmem_needed = 4 * (
        2 * TB * in_lanes            # x tile, double-buffered
        + 2 * TB * out_lanes         # out tile, double-buffered
        + _round_up(in_features, 8) * out_lanes  # resident weight
        + 8 * out_lanes              # resident bias
    )
    # Keep under v7x's 64 MiB physical VMEM (with headroom); fine on v5e/v6e.
    vmem_limit = min(max(vmem_needed + (8 << 20), 32 << 20), 56 << 20)

    out = pl.pallas_call(
        pre_classical_kernel,
        out_shape=jax.ShapeDtypeStruct((B, n_qubits), jnp.float32),
        grid=grid,
        in_specs=[
            # x: one batch tile per grid step (double-buffered by Pallas).
            pl.BlockSpec((TB, in_features), lambda i: (i, 0)),
            # weight / bias: same block every step -> resident in VMEM.
            pl.BlockSpec((in_features, n_qubits), lambda i: (0, 0)),
            pl.BlockSpec((1, n_qubits), lambda i: (0, 0)),
        ],
        out_specs=pl.BlockSpec((TB, n_qubits), lambda i: (i, 0)),
        compiler_params=pltpu.CompilerParams(
            dimension_semantics=("parallel",),
            vmem_limit_bytes=vmem_limit,
        ),
    )(xf, w1f, b1r)

    return out


if __name__ == "__main__":
    B, n_qubits = 2, 8
    in_features = 1 * 28 * 28

    key = jax.random.PRNGKey(0)
    kx, kw = jax.random.split(key, 2)

    # MNIST-like input implied by Linear(1*28*28, n_qubits).
    x = jax.random.normal(kx, (B, 1, 28, 28), dtype=jnp.float32)

    # reset_parameters(): xavier_normal_ weight, zero bias.  Stored (in, out).
    w1 = jax.random.normal(kw, (in_features, n_qubits), jnp.float32) * jnp.sqrt(
        2.0 / (in_features + n_qubits)
    )
    b1 = jnp.zeros((n_qubits,), jnp.float32)

    out = pre_classical_forward(x, w1, b1)
    jax.block_until_ready(out)

    # Pure-JAX f32 reference (same numerics as the PyTorch module's forward).
    xf_ref = x.reshape(B, -1)
    ref = jnp.tanh(
        jnp.dot(xf_ref, w1, preferred_element_type=jnp.float32,
                precision=jax.lax.Precision.HIGHEST)
        + b1
    )
    assert out.shape == (B, n_qubits)
    assert jnp.allclose(out, ref, atol=1e-4, rtol=1e-4), "mismatch vs reference"

    print("KERNEL_OK")
</pallas_src>

<mosaic_0001>
module attributes {stable_mosaic.version = 11 : i64} {
  func.func @pre_classical_kernel(%arg0: i32, %arg1: memref<2x784xf32, #tpu.memory_space<vmem>>, %arg2: memref<784x8xf32, #tpu.memory_space<vmem>>, %arg3: memref<1x8xf32, #tpu.memory_space<vmem>>, %arg4: memref<2x8xf32, #tpu.memory_space<vmem>>) attributes {dimension_semantics = [#tpu.dimension_semantics<parallel>], iteration_bounds = array<i64: 1>, scalar_prefetch = 0 : i64, scratch_operands = 0 : i64, tpu.core_type = #tpu.core_type<tc>, window_params = [{transform_indices = @transform_0, window_bounds = array<i64: 2, 784>}, {pipeline_mode = #tpu.pipeline_mode<synchronous>, transform_indices = @transform_1, window_bounds = array<i64: 784, 8>}, {pipeline_mode = #tpu.pipeline_mode<synchronous>, transform_indices = @transform_2, window_bounds = array<i64: 1, 8>}, {transform_indices = @transform_3, window_bounds = array<i64: 2, 8>}]} {
    %c0 = arith.constant 0 : index
    %c0_0 = arith.constant 0 : index
    %0 = vector.load %arg1[%c0, %c0_0] : memref<2x784xf32, #tpu.memory_space<vmem>>, vector<2x784xf32>
    %c0_1 = arith.constant 0 : index
    %c0_2 = arith.constant 0 : index
    %1 = vector.load %arg2[%c0_1, %c0_2] : memref<784x8xf32, #tpu.memory_space<vmem>>, vector<784x8xf32>
    %cst = arith.constant dense<0.000000e+00> : vector<2x8xf32>
    %2 = tpu.matmul %0, %1, %cst {dimension_numbers = #tpu.dot_dimension_numbers<[1], [0], [0], [1], [0, 0, 1, 1], [], []>, precision = #tpu.contract_precision<fp32>} : vector<2x784xf32>, vector<784x8xf32>, vector<2x8xf32> -> vector<2x8xf32>
    %c0_3 = arith.constant 0 : index
    %c0_4 = arith.constant 0 : index
    %3 = vector.load %arg3[%c0_3, %c0_4] : memref<1x8xf32, #tpu.memory_space<vmem>>, vector<1x8xf32>
    %4 = vector.broadcast %3 : vector<1x8xf32> to vector<2x8xf32>
    %5 = arith.addf %2, %4 : vector<2x8xf32>
    %6 = math.tanh %5 : vector<2x8xf32>
    %c0_5 = arith.constant 0 : index
    %c0_6 = arith.constant 0 : index
    %7 = vector.load %arg4[%c0_5, %c0_6] : memref<2x8xf32, #tpu.memory_space<vmem>>, vector<2x8xf32>
    tpu.vector_store %arg4[%c0_5, %c0_6], %6 {strides = array<i32>} : memref<2x8xf32, #tpu.memory_space<vmem>>, vector<2x8xf32>,
    return
  }
  func.func @transform_0(%arg0: i32) -> (i32, i32) {
    %c0_i32 = arith.constant 0 : i32
    %c0_i32_0 = arith.constant 0 : i32
    return %arg0, %c0_i32 : i32, i32
  }
  func.func @transform_1(%arg0: i32) -> (i32, i32) {
    %c0_i32 = arith.constant 0 : i32
    %c0_i32_0 = arith.constant 0 : i32
    %c0_i32_1 = arith.constant 0 : i32
    return %c0_i32, %c0_i32_0 : i32, i32
  }
  func.func @transform_2(%arg0: i32) -> (i32, i32) {
    %c0_i32 = arith.constant 0 : i32
    %c0_i32_0 = arith.constant 0 : i32
    %c0_i32_1 = arith.constant 0 : i32
    return %c0_i32, %c0_i32_0 : i32, i32
  }
  func.func @transform_3(%arg0: i32) -> (i32, i32) {
    %c0_i32 = arith.constant 0 : i32
    %c0_i32_0 = arith.constant 0 : i32
    return %arg0, %c0_i32 : i32, i32
  }
}

</mosaic_0001>

<llo_original>
// kernel: tpu_custom_call.1
$region0: #{tpu_custom_call.1}
  #allocation0 [shape = 'u32[]', space=smem, size = 0x4, offset = 0x4, fixed_abs, tag = 'smem constant byte address 0x4 - core index']
  #allocation1 [shape = 'u32[144,128]{1,0:T(1,128)}', space=vmem, size = 0x12000, scoped, tag = 'internal scratch']
  %s0 = inlined_call_operand.vmem [shape: f32[2,784], index: 0, kind: input, shape index: {}]
  %s1 = inlined_call_operand.vmem [shape: f32[784,8], index: 1, kind: input, shape index: {}]
  %s2 = inlined_call_operand.vmem [shape: f32[1,8], index: 2, kind: input, shape index: {}]
  %s3 = inlined_call_operand.hbm [shape: f32[2,8], index: 3, kind: output, shape index: {}]
  %s4 = sld [smem:[#allocation0]]
  $region22: #{tpu_custom_call.1} parent=0
    _
  %s6 = ssub.s32 1, %s4
  %s7 = scalar_select 0, %s6, %s4
  $region1: #{tpu_custom_call.1} parent=0
    #allocation2 [shape = 'u8[1024]{0}', space=vmem, size = 0x400, scoped, tag = 'output window, operand 0, single buffered']
    #allocation3 [shape = 's32[1]{0}', space=sflag, size = 0x4, scoped, tag = 'scoped memory for tpu_custom_call.1']
    %8 = vsyncpa [#allocation3], 0
    // Predicated region
    $region2: #{tpu_custom_call.1} parent=1 // pred_check
      _
    $region3: #{tpu_custom_call.1} parent=1 // pred_check_branch
      %10 = sbr.rel (0) target = $region5
    $region4: #{tpu_custom_call.1} parent=1 // pred_region
      _
    $region5: #{tpu_custom_call.1} parent=1 // pred_fallthru
      _
    // Predicated region
    $region6: #{tpu_custom_call.1} parent=1 // pred_check
      _
    $region7: #{tpu_custom_call.1} parent=1 // pred_check_branch
      %12 = sbr.rel (0) target = $region9
    $region8: #{tpu_custom_call.1} parent=1 // pred_region
      _
    $region9: #{tpu_custom_call.1} parent=1 // pred_fallthru
      _
    // Predicated region
    $region10: #{tpu_custom_call.1} parent=1 // pred_check
      _
    $region11: #{tpu_custom_call.1} parent=1 // pred_check_branch
      %14 = sbr.rel (0) target = $region13
    $region12: #{tpu_custom_call.1} parent=1 // pred_region
      _
    $region13: #{tpu_custom_call.1} parent=1 // pred_fallthru
      _
    %v15 = vld [vmem:[%s0] sm:$0xff]
    %v16 = vld [vmem:[%s0 + $0x8] sm:$0x3f]
    %v17 = vld [vmem:[%s1] sm:$0xff]
    %v18 = vld [vmem:[%s1 + $0x8] sm:$0xff]
    %v19 = vld [vmem:[%s1 + $0x10] sm:$0xff]
    %v20 = vld [vmem:[%s1 + $0x18] sm:$0xff]
    %v21 = vld [vmem:[%s1 + $0x20] sm:$0xff]
    %v22 = vld [vmem:[%s1 + $0x28] sm:$0xff]
    %v23 = vld [vmem:[%s1 + $0x30] sm:$0xff]
    %v24 = vld [vmem:[%s1 + $0x38] sm:$0xff]
    %v25 = vld [vmem:[%s1 + $0x40] sm:$0xff]
    %v26 = vld [vmem:[%s1 + $0x48] sm:$0xff]
    %v27 = vld [vmem:[%s1 + $0x50] sm:$0xff]
    %v28 = vld [vmem:[%s1 + $0x58] sm:$0xff]
    %v29 = vld [vmem:[%s1 + $0x60] sm:$0xff]
    %v30 = vld [vmem:[%s1 + $0x68] sm:$0xff]
    %v31 = vld [vmem:[%s1 + $0x70] sm:$0xff]
    %v32 = vld [vmem:[%s1 + $0x78] sm:$0xff]
    %v33 = vld [vmem:[%s1 + $0x80] sm:$0xff]
    %v34 = vld [vmem:[%s1 + $0x88] sm:$0xff]
    %v35 = vld [vmem:[%s1 + $0x90] sm:$0xff]
    %v36 = vld [vmem:[%s1 + $0x98] sm:$0xff]
    %v37 = vld [vmem:[%s1 + $0xa0] sm:$0xff]
    %v38 = vld [vmem:[%s1 + $0xa8] sm:$0xff]
    %v39 = vld [vmem:[%s1 + $0xb0] sm:$0xff]
    %v40 = vld [vmem:[%s1 + $0xb8] sm:$0xff]
    %v41 = vld [vmem:[%s1 + $0xc0] sm:$0xff]
    %v42 = vld [vmem:[%s1 + $0xc8] sm:$0xff]
    %v43 = vld [vmem:[%s1 + $0xd0] sm:$0xff]
    %v44 = vld [vmem:[%s1 + $0xd8] sm:$0xff]
    %v45 = vld [vmem:[%s1 + $0xe0] sm:$0xff]
    %v46 = vld [vmem:[%s1 + $0xe8] sm:$0xff]
    %v47 = vld [vmem:[%s1 + $0xf0] sm:$0xff]
    %v48 = vld [vmem:[%s1 + $0xf8] sm:$0xff]
    %v49 = vld [vmem:[%s1 + $0x100] sm:$0xff]
    %v50 = vld [vmem:[%s1 + $0x108] sm:$0xff]
    %v51 = vld [vmem:[%s1 + $0x110] sm:$0xff]
    %v52 = vld [vmem:[%s1 + $0x118] sm:$0xff]
    %v53 = vld [vmem:[%s1 + $0x120] sm:$0xff]
    %v54 = vld [vmem:[%s1 + $0x128] sm:$0xff]
    %v55 = vld [vmem:[%s1 + $0x130] sm:$0xff]
    %v56 = vld [vmem:[%s1 + $0x138] sm:$0xff]
    %v57 = vld [vmem:[%s1 + $0x140] sm:$0xff]
    %v58 = vld [vmem:[%s1 + $0x148] sm:$0xff]
    %v59 = vld [vmem:[%s1 + $0x150] sm:$0xff]
    %v60 = vld [vmem:[%s1 + $0x158] sm:$0xff]
    %v61 = vld [vmem:[%s1 + $0x160] sm:$0xff]
    %v62 = vld [vmem:[%s1 + $0x168] sm:$0xff]
    %v63 = vld [vmem:[%s1 + $0x170] sm:$0xff]
    %v64 = vld [vmem:[%s1 + $0x178] sm:$0xff]
    %v65 = vld [vmem:[%s1 + $0x180] sm:$0xff]
    %v66 = vld [vmem:[%s1 + $0x188] sm:$0xff]
    %v67 = vld [vmem:[%s1 + $0x190] sm:$0xff]
    %v68 = vld [vmem:[%s1 + $0x198] sm:$0xff]
    %v69 = vld [vmem:[%s1 + $0x1a0] sm:$0xff]
    %v70 = vld [vmem:[%s1 + $0x1a8] sm:$0xff]
    %v71 = vld [vmem:[%s1 + $0x1b0] sm:$0xff]
    %v72 = vld [vmem:[%s1 + $0x1b8] sm:$0xff]
    %v73 = vld [vmem:[%s1 + $0x1c0] sm:$0xff]
    %v74 = vld [vmem:[%s1 + $0x1c8] sm:$0xff]
    %v75 = vld [vmem:[%s1 + $0x1d0] sm:$0xff]
    %v76 = vld [vmem:[%s1 + $0x1d8] sm:$0xff]
    %v77 = vld [vmem:[%s1 + $0x1e0] sm:$0xff]
    %v78 = vld [vmem:[%s1 + $0x1e8] sm:$0xff]
    %v79 = vld [vmem:[%s1 + $0x1f0] sm:$0xff]
    %v80 = vld [vmem:[%s1 + $0x1f8] sm:$0xff]
    %v81 = vld [vmem:[%s1 + $0x200] sm:$0xff]
    %v82 = vld [vmem:[%s1 + $0x208] sm:$0xff]
    %v83 = vld [vmem:[%s1 + $0x210] sm:$0xff]
    %v84 = vld [vmem:[%s1 + $0x218] sm:$0xff]
    %v85 = vld [vmem:[%s1 + $0x220] sm:$0xff]
    %v86 = vld [vmem:[%s1 + $0x228] sm:$0xff]
    %v87 = vld [vmem:[%s1 + $0x230] sm:$0xff]
    %v88 = vld [vmem:[%s1 + $0x238] sm:$0xff]
    %v89 = vld [vmem:[%s1 + $0x240] sm:$0xff]
    %v90 = vld [vmem:[%s1 + $0x248] sm:$0xff]
    %v91 = vld [vmem:[%s1 + $0x250] sm:$0xff]
    %v92 = vld [vmem:[%s1 + $0x258] sm:$0xff]
    %v93 = vld [vmem:[%s1 + $0x260] sm:$0xff]
    %v94 = vld [vmem:[%s1 + $0x268] sm:$0xff]
    %v95 = vld [vmem:[%s1 + $0x270] sm:$0xff]
    %v96 = vld [vmem:[%s1 + $0x278] sm:$0xff]
    %v97 = vld [vmem:[%s1 + $0x280] sm:$0xff]
    %v98 = vld [vmem:[%s1 + $0x288] sm:$0xff]
    %v99 = vld [vmem:[%s1 + $0x290] sm:$0xff]
    %v100 = vld [vmem:[%s1 + $0x298] sm:$0xff]
    %v101 = vld [vmem:[%s1 + $0x2a0] sm:$0xff]
    %v102 = vld [vmem:[%s1 + $0x2a8] sm:$0xff]
    %v103 = vld [vmem:[%s1 + $0x2b0] sm:$0xff]
    %v104 = vld [vmem:[%s1 + $0x2b8] sm:$0xff]
    %v105 = vld [vmem:[%s1 + $0x2c0] sm:$0xff]
    %v106 = vld [vmem:[%s1 + $0x2c8] sm:$0xff]
    %v107 = vld [vmem:[%s1 + $0x2d0] sm:$0xff]
    %v108 = vld [vmem:[%s1 + $0x2d8] sm:$0xff]
    %v109 = vld [vmem:[%s1 + $0x2e0] sm:$0xff]
    %v110 = vld [vmem:[%s1 + $0x2e8] sm:$0xff]
    %v111 = vld [vmem:[%s1 + $0x2f0] sm:$0xff]
    %v112 = vld [vmem:[%s1 + $0x2f8] sm:$0xff]
    %v113 = vld [vmem:[%s1 + $0x300] sm:$0xff]
    %v114 = vld [vmem:[%s1 + $0x308] sm:$0xff]
    %v115 = vld [vmem:[%s2] sm:$0x1]
    %v117 = vlaneseq
    %v118 = vshrl.u32 %v117, 7
    %v119 = vsub.s32 0, %v118
    %v120 = vrot.slane %v115, %v119
    %v124 = vcombine.high %v15, %v15
    %v126 = vunpack.c.l.s4 1983009808
    %v127 = vunpack.c.0.s8 %v126
    %v128 = vlaneseq
    %v129 = vshrl.u32 %v128, 7
    %v130 = vsub.s32 %v127, %v129
    %v131 = vrot.slane %v15, %v130
    %v133 = vunpack.c.l.s4 1983009808
    %v134 = vunpack.c.0.s8 %v133
    %v135 = vlaneseq
    %v136 = vshrl.u32 %v135, 7
    %v137 = vsub.s32 %v134, %v136
    %v138 = vrot.slane %v124, %v137
    %v139 = vcombine.high %v131, %v131
    %v140 = vcombine.high %v138, %v138
    %v141 = vcombine.high %v16, %v16
    %v143 = vunpack.c.l.s4 1983009808
    %v144 = vunpack.c.0.s8 %v143
    %v145 = vlaneseq
    %v146 = vshrl.u32 %v145, 7
    %v147 = vsub.s32 %v144, %v146
    %v148 = vrot.slane %v16, %v147
    %v150 = vunpack.c.l.s4 1983009808
    %v151 = vunpack.c.0.s8 %v150
    %v152 = vlaneseq
    %v153 = vshrl.u32 %v152, 7
    %v154 = vsub.s32 %v151, %v153
    %v155 = vrot.slane %v141, %v154
    %v156 = vcombine.high %v148, %v148
    %vm163 = vcmask 130048
    %v164 = vsel %vm163, %v155, 0
    %166 = vmatprep.subr.mxu0 0.0
    %v167 = vand.u32 %v17, 4294901760
    %168 = vmatpush1.msra.mxu0 %v167
    %169 = vmatprep.subr.mxu0 0.0
    %v170 = vand.u32 %v18, 4294901760
    %171 = vmatpush1.msra.mxu0 %v170
    %172 = vmatprep.subr.mxu0 0.0
    %v173 = vand.u32 %v19, 4294901760
    %174 = vmatpush1.msra.mxu0 %v173
    %175 = vmatprep.subr.mxu0 0.0
    %v176 = vand.u32 %v20, 4294901760
    %177 = vmatpush1.msra.mxu0 %v176
    %178 = vmatprep.subr.mxu0 0.0
    %v179 = vand.u32 %v21, 4294901760
    %180 = vmatpush1.msra.mxu0 %v179
    %181 = vmatprep.subr.mxu0 0.0
    %v182 = vand.u32 %v22, 4294901760
    %183 = vmatpush1.msra.mxu0 %v182
    %184 = vmatprep.subr.mxu0 0.0
    %v185 = vand.u32 %v23, 4294901760
    %186 = vmatpush1.msra.mxu0 %v185
    %187 = vmatprep.subr.mxu0 0.0
    %v188 = vand.u32 %v24, 4294901760
    %189 = vmatpush1.msra.mxu0 %v188
    %190 = vmatprep.subr.mxu0 0.0
    %v191 = vand.u32 %v25, 4294901760
    %192 = vmatpush1.msra.mxu0 %v191
    %193 = vmatprep.subr.mxu0 0.0
    %v194 = vand.u32 %v26, 4294901760
    %195 = vmatpush1.msra.mxu0 %v194
    %196 = vmatprep.subr.mxu0 0.0
    %v197 = vand.u32 %v27, 4294901760
    %198 = vmatpush1.msra.mxu0 %v197
    %199 = vmatprep.subr.mxu0 0.0
    %v200 = vand.u32 %v28, 4294901760
    %201 = vmatpush1.msra.mxu0 %v200
    %202 = vmatprep.subr.mxu0 0.0
    %v203 = vand.u32 %v29, 4294901760
    %204 = vmatpush1.msra.mxu0 %v203
    %205 = vmatprep.subr.mxu0 0.0
    %v206 = vand.u32 %v30, 4294901760
    %207 = vmatpush1.msra.mxu0 %v206
    %208 = vmatprep.subr.mxu0 0.0
    %v209 = vand.u32 %v31, 4294901760
    %210 = vmatpush1.msra.mxu0 %v209
    %211 = vmatprep.subr.mxu0 0.0
    %v212 = vand.u32 %v32, 4294901760
    %213 = vmatpush1.msra.mxu0 %v212
    %214 = vmatprep.subr.mxu0 0.0
    %v215 = vand.u32 %v33, 4294901760
    %216 = vmatpush1.msra.mxu0 %v215
    %217 = vmatprep.subr.mxu0 0.0
    %v218 = vand.u32 %v34, 4294901760
    %219 = vmatpush1.msra.mxu0 %v218
    %220 = vmatprep.subr.mxu0 0.0
    %v221 = vand.u32 %v35, 4294901760
    %222 = vmatpush1.msra.mxu0 %v221
    %223 = vmatprep.subr.mxu0 0.0
    %v224 = vand.u32 %v36, 4294901760
    %225 = vmatpush1.msra.mxu0 %v224
    %226 = vmatprep.subr.mxu0 0.0
    %v227 = vand.u32 %v37, 4294901760
    %228 = vmatpush1.msra.mxu0 %v227
    %229 = vmatprep.subr.mxu0 0.0
    %v230 = vand.u32 %v38, 4294901760
    %231 = vmatpush1.msra.mxu0 %v230
    %232 = vmatprep.subr.mxu0 0.0
    %v233 = vand.u32 %v39, 4294901760
    %234 = vmatpush1.msra.mxu0 %v233
    %235 = vmatprep.subr.mxu0 0.0
    %v236 = vand.u32 %v40, 4294901760
    %237 = vmatpush1.msra.mxu0 %v236
    %238 = vmatprep.subr.mxu0 0.0
    %v239 = vand.u32 %v41, 4294901760
    %240 = vmatpush1.msra.mxu0 %v239
    %241 = vmatprep.subr.mxu0 0.0
    %v242 = vand.u32 %v42, 4294901760
    %243 = vmatpush1.msra.mxu0 %v242
    %244 = vmatprep.subr.mxu0 0.0
    %v245 = vand.u32 %v43, 4294901760
    %246 = vmatpush1.msra.mxu0 %v245
    %247 = vmatprep.subr.mxu0 0.0
    %v248 = vand.u32 %v44, 4294901760
    %249 = vmatpush1.msra.mxu0 %v248
    %250 = vmatprep.subr.mxu0 0.0
    %v251 = vand.u32 %v45, 4294901760
    %252 = vmatpush1.msra.mxu0 %v251
    %253 = vmatprep.subr.mxu0 0.0
    %v254 = vand.u32 %v46, 4294901760
    %255 = vmatpush1.msra.mxu0 %v254
    %256 = vmatprep.subr.mxu0 0.0
    %v257 = vand.u32 %v47, 4294901760
    %258 = vmatpush1.msra.mxu0 %v257
    %259 = vmatprep.subr.mxu0 0.0
    %v260 = vand.u32 %v48, 4294901760
    %261 = vmatpush1.msra.mxu0 %v260
    %v262 = vand.u32 %v139, 4294901760
    %v263 = vsub.f32 %v139, %v262
    %v264 = vand.u32 %v263, 4294901760
    %v265 = vsub.f32 %v263, %v264
    %v266 = vand.u32 %v265, 4294901760
    %267 = vmatprep.mubr.f32.mxu0 %v266
    %v268 = vand.u32 %v131, 4294901760
    %v269 = vsub.f32 %v131, %v268
    %v270 = vand.u32 %v269, 4294901760
    %v271 = vsub.f32 %v269, %v270
    %v272 = vand.u32 %v271, 4294901760
    %273 = vmatmul.mubr.f32.gmra.mrb[0].mxu0 %v272
    %v274 = vpop.f32.mrb[0].mxu0
    %v275 = vadd.f32 %v120, %v274
    %v276 = vpop.f32.mrb[0].mxu0
    %277 = vdwg.mxu0
    %278 = vmatprep.subr.mxu0 0.0
    %v279 = vand.u32 %v17, 4294901760
    %v280 = vsub.f32 %v17, %v279
    %v281 = vand.u32 %v280, 4294901760
    %v282 = vsub.f32 %v280, %v281
    %v283 = vand.u32 %v282, 4294901760
    %284 = vmatpush1.msra.mxu0 %v283
    %285 = vmatprep.subr.mxu0 0.0
    %v286 = vand.u32 %v18, 4294901760
    %v287 = vsub.f32 %v18, %v286
    %v288 = vand.u32 %v287, 4294901760
    %v289 = vsub.f32 %v287, %v288
    %v290 = vand.u32 %v289, 4294901760
    %291 = vmatpush1.msra.mxu0 %v290
    %292 = vmatprep.subr.mxu0 0.0
    %v293 = vand.u32 %v19, 4294901760
    %v294 = vsub.f32 %v19, %v293
    %v295 = vand.u32 %v294, 4294901760
    %v296 = vsub.f32 %v294, %v295
    %v297 = vand.u32 %v296, 4294901760
    %298 = vmatpush1.msra.mxu0 %v297
    %299 = vmatprep.subr.mxu0 0.0
    %v300 = vand.u32 %v20, 4294901760
    %v301 = vsub.f32 %v20, %v300
    %v302 = vand.u32 %v301, 4294901760
    %v303 = vsub.f32 %v301, %v302
    %v304 = vand.u32 %v303, 4294901760
    %305 = vmatpush1.msra.mxu0 %v304
    %306 = vmatprep.subr.mxu0 0.0
    %v307 = vand.u32 %v21, 4294901760
    %v308 = vsub.f32 %v21, %v307
    %v309 = vand.u32 %v308, 4294901760
    %v310 = vsub.f32 %v308, %v309
    %v311 = vand.u32 %v310, 4294901760
    %312 = vmatpush1.msra.mxu0 %v311
    %313 = vmatprep.subr.mxu0 0.0
    %v314 = vand.u32 %v22, 4294901760
    %v315 = vsub.f32 %v22, %v314
    %v316 = vand.u32 %v315, 4294901760
    %v317 = vsub.f32 %v315, %v316
    %v318 = vand.u32 %v317, 4294901760
    %319 = vmatpush1.msra.mxu0 %v318
    %320 = vmatprep.subr.mxu0 0.0
    %v321 = vand.u32 %v23, 4294901760
    %v322 = vsub.f32 %v23, %v321
    %v323 = vand.u32 %v322, 4294901760
    %v324 = vsub.f32 %v322, %v323
    %v325 = vand.u32 %v324, 4294901760
    %326 = vmatpush1.msra.mxu0 %v325
    %327 = vmatprep.subr.mxu0 0.0
    %v328 = vand.u32 %v24, 4294901760
    %v329 = vsub.f32 %v24, %v328
    %v330 = vand.u32 %v329, 4294901760
    %v331 = vsub.f32 %v329, %v330
    %v332 = vand.u32 %v331, 4294901760
    %333 = vmatpush1.msra.mxu0 %v332
    %334 = vmatprep.subr.mxu0 0.0
    %v335 = vand.u32 %v25, 4294901760
    %v336 = vsub.f32 %v25, %v335
    %v337 = vand.u32 %v336, 4294901760
    %v338 = vsub.f32 %v336, %v337
    %v339 = vand.u32 %v338, 4294901760
    %340 = vmatpush1.msra.mxu0 %v339
    %341 = vmatprep.subr.mxu0 0.0
    %v342 = vand.u32 %v26, 4294901760
    %v343 = vsub.f32 %v26, %v342
    %v344 = vand.u32 %v343, 4294901760
    %v345 = vsub.f32 %v343, %v344
    %v346 = vand.u32 %v345, 4294901760
    %347 = vmatpush1.msra.mxu0 %v346
    %348 = vmatprep.subr.mxu0 0.0
    %v349 = vand.u32 %v27, 4294901760
    %v350 = vsub.f32 %v27, %v349
    %v351 = vand.u32 %v350, 4294901760
    %v352 = vsub.f32 %v350, %v351
    %v353 = vand.u32 %v352, 4294901760
    %354 = vmatpush1.msra.mxu0 %v353
    %355 = vmatprep.subr.mxu0 0.0
    %v356 = vand.u32 %v28, 4294901760
    %v357 = vsub.f32 %v28, %v356
    %v358 = vand.u32 %v357, 4294901760
    %v359 = vsub.f32 %v357, %v358
    %v360 = vand.u32 %v359, 4294901760
    %361 = vmatpush1.msra.mxu0 %v360
    %362 = vmatprep.subr.mxu0 0.0
    %v363 = vand.u32 %v29, 4294901760
    %v364 = vsub.f32 %v29, %v363
    %v365 = vand.u32 %v364, 4294901760
    %v366 = vsub.f32 %v364, %v365
    %v367 = vand.u32 %v366, 4294901760
    %368 = vmatpush1.msra.mxu0 %v367
    %369 = vmatprep.subr.mxu0 0.0
    %v370 = vand.u32 %v30, 4294901760
    %v371 = vsub.f32 %v30, %v370
    %v372 = vand.u32 %v371, 4294901760
    %v373 = vsub.f32 %v371, %v372
    %v374 = vand.u32 %v373, 4294901760
    %375 = vmatpush1.msra.mxu0 %v374
    %376 = vmatprep.subr.mxu0 0.0
    %v377 = vand.u32 %v31, 4294901760
    %v378 = vsub.f32 %v31, %v377
    %v379 = vand.u32 %v378, 4294901760
    %v380 = vsub.f32 %v378, %v379
    %v381 = vand.u32 %v380, 4294901760
    %382 = vmatpush1.msra.mxu0 %v381
    %383 = vmatprep.subr.mxu0 0.0
    %v384 = vand.u32 %v32, 4294901760
    %v385 = vsub.f32 %v32, %v384
    %v386 = vand.u32 %v385, 4294901760
    %v387 = vsub.f32 %v385, %v386
    %v388 = vand.u32 %v387, 4294901760
    %389 = vmatpush1.msra.mxu0 %v388
    %390 = vmatprep.subr.mxu0 0.0
    %v391 = vand.u32 %v33, 4294901760
    %v392 = vsub.f32 %v33, %v391
    %v393 = vand.u32 %v392, 4294901760
    %v394 = vsub.f32 %v392, %v393
    %v395 = vand.u32 %v394, 4294901760
    %396 = vmatpush1.msra.mxu0 %v395
    %397 = vmatprep.subr.mxu0 0.0
    %v398 = vand.u32 %v34, 4294901760
    %v399 = vsub.f32 %v34, %v398
    %v400 = vand.u32 %v399, 4294901760
    %v401 = vsub.f32 %v399, %v400
    %v402 = vand.u32 %v401, 4294901760
    %403 = vmatpush1.msra.mxu0 %v402
    %404 = vmatprep.subr.mxu0 0.0
    %v405 = vand.u32 %v35, 4294901760
    %v406 = vsub.f32 %v35, %v405
    %v407 = vand.u32 %v406, 4294901760
    %v408 = vsub.f32 %v406, %v407
    %v409 = vand.u32 %v408, 4294901760
    %410 = vmatpush1.msra.mxu0 %v409
    %411 = vmatprep.subr.mxu0 0.0
    %v412 = vand.u32 %v36, 4294901760
    %v413 = vsub.f32 %v36, %v412
    %v414 = vand.u32 %v413, 4294901760
    %v415 = vsub.f32 %v413, %v414
    %v416 = vand.u32 %v415, 4294901760
    %417 = vmatpush1.msra.mxu0 %v416
    %418 = vmatprep.subr.mxu0 0.0
    %v419 = vand.u32 %v37, 4294901760
    %v420 = vsub.f32 %v37, %v419
    %v421 = vand.u32 %v420, 4294901760
    %v422 = vsub.f32 %v420, %v421
    %v423 = vand.u32 %v422, 4294901760
    %424 = vmatpush1.msra.mxu0 %v423
    %425 = vmatprep.subr.mxu0 0.0
    %v426 = vand.u32 %v38, 4294901760
    %v427 = vsub.f32 %v38, %v426
    %v428 = vand.u32 %v427, 4294901760
    %v429 = vsub.f32 %v427, %v428
    %v430 = vand.u32 %v429, 4294901760
    %431 = vmatpush1.msra.mxu0 %v430
    %432 = vmatprep.subr.mxu0 0.0
    %v433 = vand.u32 %v39, 4294901760
    %v434 = vsub.f32 %v39, %v433
    %v435 = vand.u32 %v434, 4294901760
    %v436 = vsub.f32 %v434, %v435
    %v437 = vand.u32 %v436, 4294901760
    %438 = vmatpush1.msra.mxu0 %v437
    %439 = vmatprep.subr.mxu0 0.0
    %v440 = vand.u32 %v40, 4294901760
    %v441 = vsub.f32 %v40, %v440
    %v442 = vand.u32 %v441, 4294901760
    %v443 = vsub.f32 %v441, %v442
    %v444 = vand.u32 %v443, 4294901760
    %445 = vmatpush1.msra.mxu0 %v444
    %446 = vmatprep.subr.mxu0 0.0
    %v447 = vand.u32 %v41, 4294901760
    %v448 = vsub.f32 %v41, %v447
    %v449 = vand.u32 %v448, 4294901760
    %v450 = vsub.f32 %v448, %v449
    %v451 = vand.u32 %v450, 4294901760
    %452 = vmatpush1.msra.mxu0 %v451
    %453 = vmatprep.subr.mxu0 0.0
    %v454 = vand.u32 %v42, 4294901760
    %v455 = vsub.f32 %v42, %v454
    %v456 = vand.u32 %v455, 4294901760
    %v457 = vsub.f32 %v455, %v456
    %v458 = vand.u32 %v457, 4294901760
    %459 = vmatpush1.msra.mxu0 %v458
    %460 = vmatprep.subr.mxu0 0.0
    %v461 = vand.u32 %v43, 4294901760
    %v462 = vsub.f32 %v43, %v461
    %v463 = vand.u32 %v462, 4294901760
    %v464 = vsub.f32 %v462, %v463
    %v465 = vand.u32 %v464, 4294901760
    %466 = vmatpush1.msra.mxu0 %v465
    %467 = vmatprep.subr.mxu0 0.0
    %v468 = vand.u32 %v44, 4294901760
    %v469 = vsub.f32 %v44, %v468
    %v470 = vand.u32 %v469, 4294901760
    %v471 = vsub.f32 %v469, %v470
    %v472 = vand.u32 %v471, 4294901760
    %473 = vmatpush1.msra.mxu0 %v472
    %474 = vmatprep.subr.mxu0 0.0
    %v475 = vand.u32 %v45, 4294901760
    %v476 = vsub.f32 %v45, %v475
    %v477 = vand.u32 %v476, 4294901760
    %v478 = vsub.f32 %v476, %v477
    %v479 = vand.u32 %v478, 4294901760
    %480 = vmatpush1.msra.mxu0 %v479
    %481 = vmatprep.subr.mxu0 0.0
    %v482 = vand.u32 %v46, 4294901760
    %v483 = vsub.f32 %v46, %v482
    %v484 = vand.u32 %v483, 4294901760
    %v485 = vsub.f32 %v483, %v484
    %v486 = vand.u32 %v485, 4294901760
    %487 = vmatpush1.msra.mxu0 %v486
    %488 = vmatprep.subr.mxu0 0.0
    %v489 = vand.u32 %v47, 4294901760
    %v490 = vsub.f32 %v47, %v489
    %v491 = vand.u32 %v490, 4294901760
    %v492 = vsub.f32 %v490, %v491
    %v493 = vand.u32 %v492, 4294901760
    %494 = vmatpush1.msra.mxu0 %v493
    %495 = vmatprep.subr.mxu0 0.0
    %v496 = vand.u32 %v48, 4294901760
    %v497 = vsub.f32 %v48, %v496
    %v498 = vand.u32 %v497, 4294901760
    %v499 = vsub.f32 %v497, %v498
    %v500 = vand.u32 %v499, 4294901760
    %501 = vmatpush1.msra.mxu0 %v500
    %v502 = vand.u32 %v139, 4294901760
    %503 = vmatprep.mubr.f32.mxu0 %v502
    %v504 = vand.u32 %v131, 4294901760
    %505 = vmatmul.mubr.f32.gmra.mrb[0].mxu0 %v504
    %v506 = vpop.f32.mrb[0].mxu0
    %v507 = vadd.f32 %v275, %v506
    %v508 = vpop.f32.mrb[0].mxu0
    %509 = vdwg.mxu0
    %510 = vmatprep.subr.mxu0 0.0
    %v511 = vand.u32 %v17, 4294901760
    %v512 = vsub.f32 %v17, %v511
    %513 = vmatpush1.msra.mxu0 %v512
    %514 = vmatprep.subr.mxu0 0.0
    %v515 = vand.u32 %v18, 4294901760
    %v516 = vsub.f32 %v18, %v515
    %517 = vmatpush1.msra.mxu0 %v516
    %518 = vmatprep.subr.mxu0 0.0
    %v519 = vand.u32 %v19, 4294901760
    %v520 = vsub.f32 %v19, %v519
    %521 = vmatpush1.msra.mxu0 %v520
    %522 = vmatprep.subr.mxu0 0.0
    %v523 = vand.u32 %v20, 4294901760
    %v524 = vsub.f32 %v20, %v523
    %525 = vmatpush1.msra.mxu0 %v524
    %526 = vmatprep.subr.mxu0 0.0
    %v527 = vand.u32 %v21, 4294901760
    %v528 = vsub.f32 %v21, %v527
    %529 = vmatpush1.msra.mxu0 %v528
    %530 = vmatprep.subr.mxu0 0.0
    %v531 = vand.u32 %v22, 4294901760
    %v532 = vsub.f32 %v22, %v531
    %533 = vmatpush1.msra.mxu0 %v532
    %534 = vmatprep.subr.mxu0 0.0
    %v535 = vand.u32 %v23, 4294901760
    %v536 = vsub.f32 %v23, %v535
    %537 = vmatpush1.msra.mxu0 %v536
    %538 = vmatprep.subr.mxu0 0.0
    %v539 = vand.u32 %v24, 4294901760
    %v540 = vsub.f32 %v24, %v539
    %541 = vmatpush1.msra.mxu0 %v540
    %542 = vmatprep.subr.mxu0 0.0
    %v543 = vand.u32 %v25, 4294901760
    %v544 = vsub.f32 %v25, %v543
    %545 = vmatpush1.msra.mxu0 %v544
    %546 = vmatprep.subr.mxu0 0.0
    %v547 = vand.u32 %v26, 4294901760
    %v548 = vsub.f32 %v26, %v547
    %549 = vmatpush1.msra.mxu0 %v548
    %550 = vmatprep.subr.mxu0 0.0
    %v551 = vand.u32 %v27, 4294901760
    %v552 = vsub.f32 %v27, %v551
    %553 = vmatpush1.msra.mxu0 %v552
    %554 = vmatprep.subr.mxu0 0.0
    %v555 = vand.u32 %v28, 4294901760
    %v556 = vsub.f32 %v28, %v555
    %557 = vmatpush1.msra.mxu0 %v556
    %558 = vmatprep.subr.mxu0 0.0
    %v559 = vand.u32 %v29, 4294901760
    %v560 = vsub.f32 %v29, %v559
    %561 = vmatpush1.msra.mxu0 %v560
    %562 = vmatprep.subr.mxu0 0.0
    %v563 = vand.u32 %v30, 4294901760
    %v564 = vsub.f32 %v30, %v563
    %565 = vmatpush1.msra.mxu0 %v564
    %566 = vmatprep.subr.mxu0 0.0
    %v567 = vand.u32 %v31, 4294901760
    %v568 = vsub.f32 %v31, %v567
    %569 = vmatpush1.msra.mxu0 %v568
    %570 = vmatprep.subr.mxu0 0.0
    %v571 = vand.u32 %v32, 4294901760
    %v572 = vsub.f32 %v32, %v571
    %573 = vmatpush1.msra.mxu0 %v572
    %574 = vmatprep.subr.mxu0 0.0
    %v575 = vand.u32 %v33, 4294901760
    %v576 = vsub.f32 %v33, %v575
    %577 = vmatpush1.msra.mxu0 %v576
    %578 = vmatprep.subr.mxu0 0.0
    %v579 = vand.u32 %v34, 4294901760
    %v580 = vsub.f32 %v34, %v579
    %581 = vmatpush1.msra.mxu0 %v580
    %582 = vmatprep.subr.mxu0 0.0
    %v583 = vand.u32 %v35, 4294901760
    %v584 = vsub.f32 %v35, %v583
    %585 = vmatpush1.msra.mxu0 %v584
    %586 = vmatprep.subr.mxu0 0.0
    %v587 = vand.u32 %v36, 4294901760
    %v588 = vsub.f32 %v36, %v587
    %589 = vmatpush1.msra.mxu0 %v588
    %590 = vmatprep.subr.mxu0 0.0
    %v591 = vand.u32 %v37, 4294901760
    %v592 = vsub.f32 %v37, %v591
    %593 = vmatpush1.msra.mxu0 %v592
    %594 = vmatprep.subr.mxu0 0.0
    %v595 = vand.u32 %v38, 4294901760
    %v596 = vsub.f32 %v38, %v595
    %597 = vmatpush1.msra.mxu0 %v596
    %598 = vmatprep.subr.mxu0 0.0
    %v599 = vand.u32 %v39, 4294901760
    %v600 = vsub.f32 %v39, %v599
    %601 = vmatpush1.msra.mxu0 %v600
    %602 = vmatprep.subr.mxu0 0.0
    %v603 = vand.u32 %v40, 4294901760
    %v604 = vsub.f32 %v40, %v603
    %605 = vmatpush1.msra.mxu0 %v604
    %606 = vmatprep.subr.mxu0 0.0
    %v607 = vand.u32 %v41, 4294901760
    %v608 = vsub.f32 %v41, %v607
    %609 = vmatpush1.msra.mxu0 %v608
    %610 = vmatprep.subr.mxu0 0.0
    %v611 = vand.u32 %v42, 4294901760
    %v612 = vsub.f32 %v42, %v611
    %613 = vmatpush1.msra.mxu0 %v612
    %614 = vmatprep.subr.mxu0 0.0
    %v615 = vand.u32 %v43, 4294901760
    %v616 = vsub.f32 %v43, %v615
    %617 = vmatpush1.msra.mxu0 %v616
    %618 = vmatprep.subr.mxu0 0.0
    %v619 = vand.u32 %v44, 4294901760
    %v620 = vsub.f32 %v44, %v619
    %621 = vmatpush1.msra.mxu0 %v620
    %622 = vmatprep.subr.mxu0 0.0
    %v623 = vand.u32 %v45, 4294901760
    %v624 = vsub.f32 %v45, %v623
    %625 = vmatpush1.msra.mxu0 %v624
    %626 = vmatprep.subr.mxu0 0.0
    %v627 = vand.u32 %v46, 4294901760
    %v628 = vsub.f32 %v46, %v627
    %629 = vmatpush1.msra.mxu0 %v628
    %630 = vmatprep.subr.mxu0 0.0
    %v631 = vand.u32 %v47, 4294901760
    %v632 = vsub.f32 %v47, %v631
    %633 = vmatpush1.msra.mxu0 %v632
    %634 = vmatprep.subr.mxu0 0.0
    %v635 = vand.u32 %v48, 4294901760
    %v636 = vsub.f32 %v48, %v635
    %637 = vmatpush1.msra.mxu0 %v636
    %v638 = vand.u32 %v139, 4294901760
    %v639 = vsub.f32 %v139, %v638
    %640 = vmatprep.mubr.f32.mxu0 %v639
    %v641 = vand.u32 %v131, 4294901760
    %v642 = vsub.f32 %v131, %v641
    %643 = vmatmul.mubr.f32.gmra.mrb[0].mxu0 %v642
    %v644 = vpop.f32.mrb[0].mxu0
    %v645 = vadd.f32 %v507, %v644
    %v646 = vpop.f32.mrb[0].mxu0
    %647 = vdwg.mxu0
    %648 = vmatprep.subr.mxu0 0.0
    %v649 = vand.u32 %v17, 4294901760
    %650 = vmatpush1.msra.mxu0 %v649
    %651 = vmatprep.subr.mxu0 0.0
    %v652 = vand.u32 %v18, 4294901760
    %653 = vmatpush1.msra.mxu0 %v652
    %654 = vmatprep.subr.mxu0 0.0
    %v655 = vand.u32 %v19, 4294901760
    %656 = vmatpush1.msra.mxu0 %v655
    %657 = vmatprep.subr.mxu0 0.0
    %v658 = vand.u32 %v20, 4294901760
    %659 = vmatpush1.msra.mxu0 %v658
    %660 = vmatprep.subr.mxu0 0.0
    %v661 = vand.u32 %v21, 4294901760
    %662 = vmatpush1.msra.mxu0 %v661
    %663 = vmatprep.subr.mxu0 0.0
    %v664 = vand.u32 %v22, 4294901760
    %665 = vmatpush1.msra.mxu0 %v664
    %666 = vmatprep.subr.mxu0 0.0
    %v667 = vand.u32 %v23, 4294901760
    %668 = vmatpush1.msra.mxu0 %v667
    %669 = vmatprep.subr.mxu0 0.0
    %v670 = vand.u32 %v24, 4294901760
    %671 = vmatpush1.msra.mxu0 %v670
    %672 = vmatprep.subr.mxu0 0.0
    %v673 = vand.u32 %v25, 4294901760
    %674 = vmatpush1.msra.mxu0 %v673
    %675 = vmatprep.subr.mxu0 0.0
    %v676 = vand.u32 %v26, 4294901760
    %677 = vmatpush1.msra.mxu0 %v676
    %678 = vmatprep.subr.mxu0 0.0
    %v679 = vand.u32 %v27, 4294901760
    %680 = vmatpush1.msra.mxu0 %v679
    %681 = vmatprep.subr.mxu0 0.0
    %v682 = vand.u32 %v28, 4294901760
    %683 = vmatpush1.msra.mxu0 %v682
    %684 = vmatprep.subr.mxu0 0.0
    %v685 = vand.u32 %v29, 4294901760
    %686 = vmatpush1.msra.mxu0 %v685
    %687 = vmatprep.subr.mxu0 0.0
    %v688 = vand.u32 %v30, 4294901760
    %689 = vmatpush1.msra.mxu0 %v688
    %690 = vmatprep.subr.mxu0 0.0
    %v691 = vand.u32 %v31, 4294901760
    %692 = vmatpush1.msra.mxu0 %v691
    %693 = vmatprep.subr.mxu0 0.0
    %v694 = vand.u32 %v32, 4294901760
    %695 = vmatpush1.msra.mxu0 %v694
    %696 = vmatprep.subr.mxu0 0.0
    %v697 = vand.u32 %v33, 4294901760
    %698 = vmatpush1.msra.mxu0 %v697
    %699 = vmatprep.subr.mxu0 0.0
    %v700 = vand.u32 %v34, 4294901760
    %701 = vmatpush1.msra.mxu0 %v700
    %702 = vmatprep.subr.mxu0 0.0
    %v703 = vand.u32 %v35, 4294901760
    %704 = vmatpush1.msra.mxu0 %v703
    %705 = vmatprep.subr.mxu0 0.0
    %v706 = vand.u32 %v36, 4294901760
    %707 = vmatpush1.msra.mxu0 %v706
    %708 = vmatprep.subr.mxu0 0.0
    %v709 = vand.u32 %v37, 4294901760
    %710 = vmatpush1.msra.mxu0 %v709
    %711 = vmatprep.subr.mxu0 0.0
    %v712 = vand.u32 %v38, 4294901760
    %713 = vmatpush1.msra.mxu0 %v712
    %714 = vmatprep.subr.mxu0 0.0
    %v715 = vand.u32 %v39, 4294901760
    %716 = vmatpush1.msra.mxu0 %v715
    %717 = vmatprep.subr.mxu0 0.0
    %v718 = vand.u32 %v40, 4294901760
    %719 = vmatpush1.msra.mxu0 %v718
    %720 = vmatprep.subr.mxu0 0.0
    %v721 = vand.u32 %v41, 4294901760
    %722 = vmatpush1.msra.mxu0 %v721
    %723 = vmatprep.subr.mxu0 0.0
    %v724 = vand.u32 %v42, 4294901760
    %725 = vmatpush1.msra.mxu0 %v724
    %726 = vmatprep.subr.mxu0 0.0
    %v727 = vand.u32 %v43, 4294901760
    %728 = vmatpush1.msra.mxu0 %v727
    %729 = vmatprep.subr.mxu0 0.0
    %v730 = vand.u32 %v44, 4294901760
    %731 = vmatpush1.msra.mxu0 %v730
    %732 = vmatprep.subr.mxu0 0.0
    %v733 = vand.u32 %v45, 4294901760
    %734 = vmatpush1.msra.mxu0 %v733
    %735 = vmatprep.subr.mxu0 0.0
    %v736 = vand.u32 %v46, 4294901760
    %737 = vmatpush1.msra.mxu0 %v736
    %738 = vmatprep.subr.mxu0 0.0
    %v739 = vand.u32 %v47, 4294901760
    %740 = vmatpush1.msra.mxu0 %v739
    %741 = vmatprep.subr.mxu0 0.0
    %v742 = vand.u32 %v48, 4294901760
    %743 = vmatpush1.msra.mxu0 %v742
    %v744 = vand.u32 %v139, 4294901760
    %v745 = vsub.f32 %v139, %v744
    %v746 = vand.u32 %v745, 4294901760
    %747 = vmatprep.mubr.f32.mxu0 %v746
    %v748 = vand.u32 %v131, 4294901760
    %v749 = vsub.f32 %v131, %v748
    %v750 = vand.u32 %v749, 4294901760
    %751 = vmatmul.mubr.f32.gmra.mrb[0].mxu0 %v750
    %v752 = vpop.f32.mrb[0].mxu0
    %v753 = vadd.f32 %v645, %v752
    %v754 = vpop.f32.mrb[0].mxu0
    %755 = vdwg.mxu0
    %756 = vmatprep.subr.mxu0 0.0
    %v757 = vand.u32 %v17, 4294901760
    %v758 = vsub.f32 %v17, %v757
    %v759 = vand.u32 %v758, 4294901760
    %760 = vmatpush1.msra.mxu0 %v759
    %761 = vmatprep.subr.mxu0 0.0
    %v762 = vand.u32 %v18, 4294901760
    %v763 = vsub.f32 %v18, %v762
    %v764 = vand.u32 %v763, 4294901760
    %765 = vmatpush1.msra.mxu0 %v764
    %766 = vmatprep.subr.mxu0 0.0
    %v767 = vand.u32 %v19, 4294901760
    %v768 = vsub.f32 %v19, %v767
    %v769 = vand.u32 %v768, 4294901760
    %770 = vmatpush1.msra.mxu0 %v769
    %771 = vmatprep.subr.mxu0 0.0
    %v772 = vand.u32 %v20, 4294901760
    %v773 = vsub.f32 %v20, %v772
    %v774 = vand.u32 %v773, 4294901760
    %775 = vmatpush1.msra.mxu0 %v774
    %776 = vmatprep.subr.mxu0 0.0
    %v777 = vand.u32 %v21, 4294901760
    %v778 = vsub.f32 %v21, %v777
    %v779 = vand.u32 %v778, 4294901760
    %780 = vmatpush1.msra.mxu0 %v779
    %781 = vmatprep.subr.mxu0 0.0
    %v782 = vand.u32 %v22, 4294901760
    %v783 = vsub.f32 %v22, %v782
    %v784 = vand.u32 %v783, 4294901760
    %785 = vmatpush1.msra.mxu0 %v784
    %786 = vmatprep.subr.mxu0 0.0
    %v787 = vand.u32 %v23, 4294901760
    %v788 = vsub.f32 %v23, %v787
    %v789 = vand.u32 %v788, 4294901760
    %790 = vmatpush1.msra.mxu0 %v789
    %791 = vmatprep.subr.mxu0 0.0
    %v792 = vand.u32 %v24, 4294901760
    %v793 = vsub.f32 %v24, %v792
    %v794 = vand.u32 %v793, 4294901760
    %795 = vmatpush1.msra.mxu0 %v794
    %796 = vmatprep.subr.mxu0 0.0
    %v797 = vand.u32 %v25, 4294901760
    %v798 = vsub.f32 %v25, %v797
    %v799 = vand.u32 %v798, 4294901760
    %800 = vmatpush1.msra.mxu0 %v799
    %801 = vmatprep.subr.mxu0 0.0
    %v802 = vand.u32 %v26, 4294901760
    %v803 = vsub.f32 %v26, %v802
    %v804 = vand.u32 %v803, 4294901760
    %805 = vmatpush1.msra.mxu0 %v804
    %806 = vmatprep.subr.mxu0 0.0
    %v807 = vand.u32 %v27, 4294901760
    %v808 = vsub.f32 %v27, %v807
    %v809 = vand.u32 %v808, 4294901760
    %810 = vmatpush1.msra.mxu0 %v809
    %811 = vmatprep.subr.mxu0 0.0
    %v812 = vand.u32 %v28, 4294901760
    %v813 = vsub.f32 %v28, %v812
    %v814 = vand.u32 %v813, 4294901760
    %815 = vmatpush1.msra.mxu0 %v814
    %816 = vmatprep.subr.mxu0 0.0
    %v817 = vand.u32 %v29, 4294901760
    %v818 = vsub.f32 %v29, %v817
    %v819 = vand.u32 %v818, 4294901760
    %820 = vmatpush1.msra.mxu0 %v819
    %821 = vmatprep.subr.mxu0 0.0
    %v822 = vand.u32 %v30, 4294901760
    %v823 = vsub.f32 %v30, %v822
    %v824 = vand.u32 %v823, 4294901760
    %825 = vmatpush1.msra.mxu0 %v824
    %826 = vmatprep.subr.mxu0 0.0
    %v827 = vand.u32 %v31, 4294901760
    %v828 = vsub.f32 %v31, %v827
    %v829 = vand.u32 %v828, 4294901760
    %830 = vmatpush1.msra.mxu0 %v829
    %831 = vmatprep.subr.mxu0 0.0
    %v832 = vand.u32 %v32, 4294901760
    %v833 = vsub.f32 %v32, %v832
    %v834 = vand.u32 %v833, 4294901760
    %835 = vmatpush1.msra.mxu0 %v834
    %836 = vmatprep.subr.mxu0 0.0
    %v837 = vand.u32 %v33, 4294901760
    %v838 = vsub.f32 %v33, %v837
    %v839 = vand.u32 %v838, 4294901760
    %840 = vmatpush1.msra.mxu0 %v839
    %841 = vmatprep.subr.mxu0 0.0
    %v842 = vand.u32 %v34, 4294901760
    %v843 = vsub.f32 %v34, %v842
    %v844 = vand.u32 %v843, 4294901760
    %845 = vmatpush1.msra.mxu0 %v844
    %846 = vmatprep.subr.mxu0 0.0
    %v847 = vand.u32 %v35, 4294901760
    %v848 = vsub.f32 %v35, %v847
    %v849 = vand.u32 %v848, 4294901760
    %850 = vmatpush1.msra.mxu0 %v849
    %851 = vmatprep.subr.mxu0 0.0
    %v852 = vand.u32 %v36, 4294901760
    %v853 = vsub.f32 %v36, %v852
    %v854 = vand.u32 %v853, 4294901760
    %855 = vmatpush1.msra.mxu0 %v854
    %856 = vmatprep.subr.mxu0 0.0
    %v857 = vand.u32 %v37, 4294901760
    %v858 = vsub.f32 %v37, %v857
    %v859 = vand.u32 %v858, 4294901760
    %860 = vmatpush1.msra.mxu0 %v859
    %861 = vmatprep.subr.mxu0 0.0
    %v862 = vand.u32 %v38, 4294901760
    %v863 = vsub.f32 %v38, %v862
    %v864 = vand.u32 %v863, 4294901760
    %865 = vmatpush1.msra.mxu0 %v864
    %866 = vmatprep.subr.mxu0 0.0
    %v867 = vand.u32 %v39, 4294901760
    %v868 = vsub.f32 %v39, %v867
    %v869 = vand.u32 %v868, 4294901760
    %870 = vmatpush1.msra.mxu0 %v869
    %871 = vmatprep.subr.mxu0 0.0
    %v872 = vand.u32 %v40, 4294901760
    %v873 = vsub.f32 %v40, %v872
    %v874 = vand.u32 %v873, 4294901760
    %875 = vmatpush1.msra.mxu0 %v874
    %876 = vmatprep.subr.mxu0 0.0
    %v877 = vand.u32 %v41, 4294901760
    %v878 = vsub.f32 %v41, %v877
    %v879 = vand.u32 %v878, 4294901760
    %880 = vmatpush1.msra.mxu0 %v879
    %881 = vmatprep.subr.mxu0 0.0
    %v882 = vand.u32 %v42, 4294901760
    %v883 = vsub.f32 %v42, %v882
    %v884 = vand.u32 %v883, 4294901760
    %885 = vmatpush1.msra.mxu0 %v884
    %886 = vmatprep.subr.mxu0 0.0
    %v887 = vand.u32 %v43, 4294901760
    %v888 = vsub.f32 %v43, %v887
    %v889 = vand.u32 %v888, 4294901760
    %890 = vmatpush1.msra.mxu0 %v889
    %891 = vmatprep.subr.mxu0 0.0
    %v892 = vand.u32 %v44, 4294901760
    %v893 = vsub.f32 %v44, %v892
    %v894 = vand.u32 %v893, 4294901760
    %895 = vmatpush1.msra.mxu0 %v894
    %896 = vmatprep.subr.mxu0 0.0
    %v897 = vand.u32 %v45, 4294901760
    %v898 = vsub.f32 %v45, %v897
    %v899 = vand.u32 %v898, 4294901760
    %900 = vmatpush1.msra.mxu0 %v899
    %901 = vmatprep.subr.mxu0 0.0
    %v902 = vand.u32 %v46, 4294901760
    %v903 = vsub.f32 %v46, %v902
    %v904 = vand.u32 %v903, 4294901760
    %905 = vmatpush1.msra.mxu0 %v904
    %906 = vmatprep.subr.mxu0 0.0
    %v907 = vand.u32 %v47, 4294901760
    %v908 = vsub.f32 %v47, %v907
    %v909 = vand.u32 %v908, 4294901760
    %910 = vmatpush1.msra.mxu0 %v909
    %911 = vmatprep.subr.mxu0 0.0
    %v912 = vand.u32 %v48, 4294901760
    %v913 = vsub.f32 %v48, %v912
    %v914 = vand.u32 %v913, 4294901760
    %915 = vmatpush1.msra.mxu0 %v914
    %v916 = vand.u32 %v139, 4294901760
    %917 = vmatprep.mubr.f32.mxu0 %v916
    %v918 = vand.u32 %v131, 4294901760
    %919 = vmatmul.mubr.f32.gmra.mrb[0].mxu0 %v918
    %v920 = vpop.f32.mrb[0].mxu0
    %v921 = vadd.f32 %v753, %v920
    %v922 = vpop.f32.mrb[0].mxu0
    %923 = vdwg.mxu0
    %924 = vmatprep.subr.mxu0 0.0
    %v925 = vand.u32 %v17, 4294901760
    %926 = vmatpush1.msra.mxu0 %v925
    %927 = vmatprep.subr.mxu0 0.0
    %v928 = vand.u32 %v18, 4294901760
    %929 = vmatpush1.msra.mxu0 %v928
    %930 = vmatprep.subr.mxu0 0.0
    %v931 = vand.u32 %v19, 4294901760
    %932 = vmatpush1.msra.mxu0 %v931
    %933 = vmatprep.subr.mxu0 0.0
    %v934 = vand.u32 %v20, 4294901760
    %935 = vmatpush1.msra.mxu0 %v934
    %936 = vmatprep.subr.mxu0 0.0
    %v937 = vand.u32 %v21, 4294901760
    %938 = vmatpush1.msra.mxu0 %v937
    %939 = vmatprep.subr.mxu0 0.0
    %v940 = vand.u32 %v22, 4294901760
    %941 = vmatpush1.msra.mxu0 %v940
    %942 = vmatprep.subr.mxu0 0.0
    %v943 = vand.u32 %v23, 4294901760
    %944 = vmatpush1.msra.mxu0 %v943
    %945 = vmatprep.subr.mxu0 0.0
    %v946 = vand.u32 %v24, 4294901760
    %947 = vmatpush1.msra.mxu0 %v946
    %948 = vmatprep.subr.mxu0 0.0
    %v949 = vand.u32 %v25, 4294901760
    %950 = vmatpush1.msra.mxu0 %v949
    %951 = vmatprep.subr.mxu0 0.0
    %v952 = vand.u32 %v26, 4294901760
    %953 = vmatpush1.msra.mxu0 %v952
    %954 = vmatprep.subr.mxu0 0.0
    %v955 = vand.u32 %v27, 4294901760
    %956 = vmatpush1.msra.mxu0 %v955
    %957 = vmatprep.subr.mxu0 0.0
    %v958 = vand.u32 %v28, 4294901760
    %959 = vmatpush1.msra.mxu0 %v958
    %960 = vmatprep.subr.mxu0 0.0
    %v961 = vand.u32 %v29, 4294901760
    %962 = vmatpush1.msra.mxu0 %v961
    %963 = vmatprep.subr.mxu0 0.0
    %v964 = vand.u32 %v30, 4294901760
    %965 = vmatpush1.msra.mxu0 %v964
    %966 = vmatprep.subr.mxu0 0.0
    %v967 = vand.u32 %v31, 4294901760
    %968 = vmatpush1.msra.mxu0 %v967
    %969 = vmatprep.subr.mxu0 0.0
    %v970 = vand.u32 %v32, 4294901760
    %971 = vmatpush1.msra.mxu0 %v970
    %972 = vmatprep.subr.mxu0 0.0
    %v973 = vand.u32 %v33, 4294901760
    %974 = vmatpush1.msra.mxu0 %v973
    %975 = vmatprep.subr.mxu0 0.0
    %v976 = vand.u32 %v34, 4294901760
    %977 = vmatpush1.msra.mxu0 %v976
    %978 = vmatprep.subr.mxu0 0.0
    %v979 = vand.u32 %v35, 4294901760
    %980 = vmatpush1.msra.mxu0 %v979
    %981 = vmatprep.subr.mxu0 0.0
    %v982 = vand.u32 %v36, 4294901760
    %983 = vmatpush1.msra.mxu0 %v982
    %984 = vmatprep.subr.mxu0 0.0
    %v985 = vand.u32 %v37, 4294901760
    %986 = vmatpush1.msra.mxu0 %v985
    %987 = vmatprep.subr.mxu0 0.0
    %v988 = vand.u32 %v38, 4294901760
    %989 = vmatpush1.msra.mxu0 %v988
    %990 = vmatprep.subr.mxu0 0.0
    %v991 = vand.u32 %v39, 4294901760
    %992 = vmatpush1.msra.mxu0 %v991
    %993 = vmatprep.subr.mxu0 0.0
    %v994 = vand.u32 %v40, 4294901760
    %995 = vmatpush1.msra.mxu0 %v994
    %996 = vmatprep.subr.mxu0 0.0
    %v997 = vand.u32 %v41, 4294901760
    %998 = vmatpush1.msra.mxu0 %v997
    %999 = vmatprep.subr.mxu0 0.0
    %v1000 = vand.u32 %v42, 4294901760
    %1001 = vmatpush1.msra.mxu0 %v1000
    %1002 = vmatprep.subr.mxu0 0.0
    %v1003 = vand.u32 %v43, 4294901760
    %1004 = vmatpush1.msra.mxu0 %v1003
    %1005 = vmatprep.subr.mxu0 0.0
    %v1006 = vand.u32 %v44, 4294901760
    %1007 = vmatpush1.msra.mxu0 %v1006
    %1008 = vmatprep.subr.mxu0 0.0
    %v1009 = vand.u32 %v45, 4294901760
    %1010 = vmatpush1.msra.mxu0 %v1009
    %1011 = vmatprep.subr.mxu0 0.0
    %v1012 = vand.u32 %v46, 4294901760
    %1013 = vmatpush1.msra.mxu0 %v1012
    %1014 = vmatprep.subr.mxu0 0.0
    %v1015 = vand.u32 %v47, 4294901760
    %1016 = vmatpush1.msra.mxu0 %v1015
    %1017 = vmatprep.subr.mxu0 0.0
    %v1018 = vand.u32 %v48, 4294901760
    %1019 = vmatpush1.msra.mxu0 %v1018
    %v1020 = vand.u32 %v139, 4294901760
    %1021 = vmatprep.mubr.f32.mxu0 %v1020
    %v1022 = vand.u32 %v131, 4294901760
    %1023 = vmatmul.mubr.f32.gmra.mrb[0].mxu0 %v1022
    %v1024 = vpop.f32.mrb[0].mxu0
    %v1025 = vadd.f32 %v921, %v1024
    %v1026 = vpop.f32.mrb[0].mxu0
    %1027 = vdwg.mxu0
    %1028 = vmatprep.subr.mxu0 0.0
    %v1029 = vand.u32 %v49, 4294901760
    %1030 = vmatpush1.msra.mxu0 %v1029
    %1031 = vmatprep.subr.mxu0 0.0
    %v1032 = vand.u32 %v50, 4294901760
    %1033 = vmatpush1.msra.mxu0 %v1032
    %1034 = vmatprep.subr.mxu0 0.0
    %v1035 = vand.u32 %v51, 4294901760
    %1036 = vmatpush1.msra.mxu0 %v1035
    %1037 = vmatprep.subr.mxu0 0.0
    %v1038 = vand.u32 %v52, 4294901760
    %1039 = vmatpush1.msra.mxu0 %v1038
    %1040 = vmatprep.subr.mxu0 0.0
    %v1041 = vand.u32 %v53, 4294901760
    %1042 = vmatpush1.msra.mxu0 %v1041
    %1043 = vmatprep.subr.mxu0 0.0
    %v1044 = vand.u32 %v54, 4294901760
    %1045 = vmatpush1.msra.mxu0 %v1044
    %1046 = vmatprep.subr.mxu0 0.0
    %v1047 = vand.u32 %v55, 4294901760
    %1048 = vmatpush1.msra.mxu0 %v1047
    %1049 = vmatprep.subr.mxu0 0.0
    %v1050 = vand.u32 %v56, 4294901760
    %1051 = vmatpush1.msra.mxu0 %v1050
    %1052 = vmatprep.subr.mxu0 0.0
    %v1053 = vand.u32 %v57, 4294901760
    %1054 = vmatpush1.msra.mxu0 %v1053
    %1055 = vmatprep.subr.mxu0 0.0
    %v1056 = vand.u32 %v58, 4294901760
    %1057 = vmatpush1.msra.mxu0 %v1056
    %1058 = vmatprep.subr.mxu0 0.0
    %v1059 = vand.u32 %v59, 4294901760
    %1060 = vmatpush1.msra.mxu0 %v1059
    %1061 = vmatprep.subr.mxu0 0.0
    %v1062 = vand.u32 %v60, 4294901760
    %1063 = vmatpush1.msra.mxu0 %v1062
    %1064 = vmatprep.subr.mxu0 0.0
    %v1065 = vand.u32 %v61, 4294901760
    %1066 = vmatpush1.msra.mxu0 %v1065
    %1067 = vmatprep.subr.mxu0 0.0
    %v1068 = vand.u32 %v62, 4294901760
    %1069 = vmatpush1.msra.mxu0 %v1068
    %1070 = vmatprep.subr.mxu0 0.0
    %v1071 = vand.u32 %v63, 4294901760
    %1072 = vmatpush1.msra.mxu0 %v1071
    %1073 = vmatprep.subr.mxu0 0.0
    %v1074 = vand.u32 %v64, 4294901760
    %1075 = vmatpush1.msra.mxu0 %v1074
    %1076 = vmatprep.subr.mxu0 0.0
    %v1077 = vand.u32 %v65, 4294901760
    %1078 = vmatpush1.msra.mxu0 %v1077
    %1079 = vmatprep.subr.mxu0 0.0
    %v1080 = vand.u32 %v66, 4294901760
    %1081 = vmatpush1.msra.mxu0 %v1080
    %1082 = vmatprep.subr.mxu0 0.0
    %v1083 = vand.u32 %v67, 4294901760
    %1084 = vmatpush1.msra.mxu0 %v1083
    %1085 = vmatprep.subr.mxu0 0.0
    %v1086 = vand.u32 %v68, 4294901760
    %1087 = vmatpush1.msra.mxu0 %v1086
    %1088 = vmatprep.subr.mxu0 0.0
    %v1089 = vand.u32 %v69, 4294901760
    %1090 = vmatpush1.msra.mxu0 %v1089
    %1091 = vmatprep.subr.mxu0 0.0
    %v1092 = vand.u32 %v70, 4294901760
    %1093 = vmatpush1.msra.mxu0 %v1092
    %1094 = vmatprep.subr.mxu0 0.0
    %v1095 = vand.u32 %v71, 4294901760
    %1096 = vmatpush1.msra.mxu0 %v1095
    %1097 = vmatprep.subr.mxu0 0.0
    %v1098 = vand.u32 %v72, 4294901760
    %1099 = vmatpush1.msra.mxu0 %v1098
    %1100 = vmatprep.subr.mxu0 0.0
    %v1101 = vand.u32 %v73, 4294901760
    %1102 = vmatpush1.msra.mxu0 %v1101
    %1103 = vmatprep.subr.mxu0 0.0
    %v1104 = vand.u32 %v74, 4294901760
    %1105 = vmatpush1.msra.mxu0 %v1104
    %1106 = vmatprep.subr.mxu0 0.0
    %v1107 = vand.u32 %v75, 4294901760
    %1108 = vmatpush1.msra.mxu0 %v1107
    %1109 = vmatprep.subr.mxu0 0.0
    %v1110 = vand.u32 %v76, 4294901760
    %1111 = vmatpush1.msra.mxu0 %v1110
    %1112 = vmatprep.subr.mxu0 0.0
    %v1113 = vand.u32 %v77, 4294901760
    %1114 = vmatpush1.msra.mxu0 %v1113
    %1115 = vmatprep.subr.mxu0 0.0
    %v1116 = vand.u32 %v78, 4294901760
    %1117 = vmatpush1.msra.mxu0 %v1116
    %1118 = vmatprep.subr.mxu0 0.0
    %v1119 = vand.u32 %v79, 4294901760
    %1120 = vmatpush1.msra.mxu0 %v1119
    %1121 = vmatprep.subr.mxu0 0.0
    %v1122 = vand.u32 %v80, 4294901760
    %1123 = vmatpush1.msra.mxu0 %v1122
    %v1124 = vand.u32 %v140, 4294901760
    %v1125 = vsub.f32 %v140, %v1124
    %v1126 = vand.u32 %v1125, 4294901760
    %v1127 = vsub.f32 %v1125, %v1126
    %v1128 = vand.u32 %v1127, 4294901760
    %1129 = vmatprep.mubr.f32.mxu0 %v1128
    %v1130 = vand.u32 %v138, 4294901760
    %v1131 = vsub.f32 %v138, %v1130
    %v1132 = vand.u32 %v1131, 4294901760
    %v1133 = vsub.f32 %v1131, %v1132
    %v1134 = vand.u32 %v1133, 4294901760
    %1135 = vmatmul.mubr.f32.gmra.mrb[0].mxu0 %v1134
    %v1136 = vpop.f32.mrb[0].mxu0
    %v1137 = vadd.f32 %v1025, %v1136
    %v1138 = vpop.f32.mrb[0].mxu0
    %1139 = vdwg.mxu0
    %1140 = vmatprep.subr.mxu0 0.0
    %v1141 = vand.u32 %v49, 4294901760
    %v1142 = vsub.f32 %v49, %v1141
    %v1143 = vand.u32 %v1142, 4294901760
    %v1144 = vsub.f32 %v1142, %v1143
    %v1145 = vand.u32 %v1144, 4294901760
    %1146 = vmatpush1.msra.mxu0 %v1145
    %1147 = vmatprep.subr.mxu0 0.0
    %v1148 = vand.u32 %v50, 4294901760
    %v1149 = vsub.f32 %v50, %v1148
    %v1150 = vand.u32 %v1149, 4294901760
    %v1151 = vsub.f32 %v1149, %v1150
    %v1152 = vand.u32 %v1151, 4294901760
    %1153 = vmatpush1.msra.mxu0 %v1152
    %1154 = vmatprep.subr.mxu0 0.0
    %v1155 = vand.u32 %v51, 4294901760
    %v1156 = vsub.f32 %v51, %v1155
    %v1157 = vand.u32 %v1156, 4294901760
    %v1158 = vsub.f32 %v1156, %v1157
    %v1159 = vand.u32 %v1158, 4294901760
    %1160 = vmatpush1.msra.mxu0 %v1159
    %1161 = vmatprep.subr.mxu0 0.0
    %v1162 = vand.u32 %v52, 4294901760
    %v1163 = vsub.f32 %v52, %v1162
    %v1164 = vand.u32 %v1163, 4294901760
    %v1165 = vsub.f32 %v1163, %v1164
    %v1166 = vand.u32 %v1165, 4294901760
    %1167 = vmatpush1.msra.mxu0 %v1166
    %1168 = vmatprep.subr.mxu0 0.0
    %v1169 = vand.u32 %v53, 4294901760
    %v1170 = vsub.f32 %v53, %v1169
    %v1171 = vand.u32 %v1170, 4294901760
    %v1172 = vsub.f32 %v1170, %v1171
    %v1173 = vand.u32 %v1172, 4294901760
    %1174 = vmatpush1.msra.mxu0 %v1173
    %1175 = vmatprep.subr.mxu0 0.0
    %v1176 = vand.u32 %v54, 4294901760
    %v1177 = vsub.f32 %v54, %v1176
    %v1178 = vand.u32 %v1177, 4294901760
    %v1179 = vsub.f32 %v1177, %v1178
    %v1180 = vand.u32 %v1179, 4294901760
    %1181 = vmatpush1.msra.mxu0 %v1180
    %1182 = vmatprep.subr.mxu0 0.0
    %v1183 = vand.u32 %v55, 4294901760
    %v1184 = vsub.f32 %v55, %v1183
    %v1185 = vand.u32 %v1184, 4294901760
    %v1186 = vsub.f32 %v1184, %v1185
    %v1187 = vand.u32 %v1186, 4294901760
    %1188 = vmatpush1.msra.mxu0 %v1187
    %1189 = vmatprep.subr.mxu0 0.0
    %v1190 = vand.u32 %v56, 4294901760
    %v1191 = vsub.f32 %v56, %v1190
    %v1192 = vand.u32 %v1191, 4294901760
    %v1193 = vsub.f32 %v1191, %v1192
    %v1194 = vand.u32 %v1193, 4294901760
    %1195 = vmatpush1.msra.mxu0 %v1194
    %1196 = vmatprep.subr.mxu0 0.0
    %v1197 = vand.u32 %v57, 4294901760
    %v1198 = vsub.f32 %v57, %v1197
    %v1199 = vand.u32 %v1198, 4294901760
    %v1200 = vsub.f32 %v1198, %v1199
    %v1201 = vand.u32 %v1200, 4294901760
    %1202 = vmatpush1.msra.mxu0 %v1201
    %1203 = vmatprep.subr.mxu0 0.0
    %v1204 = vand.u32 %v58, 4294901760
    %v1205 = vsub.f32 %v58, %v1204
    %v1206 = vand.u32 %v1205, 4294901760
    %v1207 = vsub.f32 %v1205, %v1206
    %v1208 = vand.u32 %v1207, 4294901760
    %1209 = vmatpush1.msra.mxu0 %v1208
    %1210 = vmatprep.subr.mxu0 0.0
    %v1211 = vand.u32 %v59, 4294901760
    %v1212 = vsub.f32 %v59, %v1211
    %v1213 = vand.u32 %v1212, 4294901760
    %v1214 = vsub.f32 %v1212, %v1213
    %v1215 = vand.u32 %v1214, 4294901760
    %1216 = vmatpush1.msra.mxu0 %v1215
    %1217 = vmatprep.subr.mxu0 0.0
    %v1218 = vand.u32 %v60, 4294901760
    %v1219 = vsub.f32 %v60, %v1218
    %v1220 = vand.u32 %v1219, 4294901760
    %v1221 = vsub.f32 %v1219, %v1220
    %v1222 = vand.u32 %v1221, 4294901760
    %1223 = vmatpush1.msra.mxu0 %v1222
    %1224 = vmatprep.subr.mxu0 0.0
    %v1225 = vand.u32 %v61, 4294901760
    %v1226 = vsub.f32 %v61, %v1225
    %v1227 = vand.u32 %v1226, 4294901760
    %v1228 = vsub.f32 %v1226, %v1227
    %v1229 = vand.u32 %v1228, 4294901760
    %1230 = vmatpush1.msra.mxu0 %v1229
    %1231 = vmatprep.subr.mxu0 0.0
    %v1232 = vand.u32 %v62, 4294901760
    %v1233 = vsub.f32 %v62, %v1232
    %v1234 = vand.u32 %v1233, 4294901760
    %v1235 = vsub.f32 %v1233, %v1234
    %v1236 = vand.u32 %v1235, 4294901760
    %1237 = vmatpush1.msra.mxu0 %v1236
    %1238 = vmatprep.subr.mxu0 0.0
    %v1239 = vand.u32 %v63, 4294901760
    %v1240 = vsub.f32 %v63, %v1239
    %v1241 = vand.u32 %v1240, 4294901760
    %v1242 = vsub.f32 %v1240, %v1241
    %v1243 = vand.u32 %v1242, 4294901760
    %1244 = vmatpush1.msra.mxu0 %v1243
    %1245 = vmatprep.subr.mxu0 0.0
    %v1246 = vand.u32 %v64, 4294901760
    %v1247 = vsub.f32 %v64, %v1246
    %v1248 = vand.u32 %v1247, 4294901760
    %v1249 = vsub.f32 %v1247, %v1248
    %v1250 = vand.u32 %v1249, 4294901760
    %1251 = vmatpush1.msra.mxu0 %v1250
    %1252 = vmatprep.subr.mxu0 0.0
    %v1253 = vand.u32 %v65, 4294901760
    %v1254 = vsub.f32 %v65, %v1253
    %v1255 = vand.u32 %v1254, 4294901760
    %v1256 = vsub.f32 %v1254, %v1255
    %v1257 = vand.u32 %v1256, 4294901760
    %1258 = vmatpush1.msra.mxu0 %v1257
    %1259 = vmatprep.subr.mxu0 0.0
    %v1260 = vand.u32 %v66, 4294901760
    %v1261 = vsub.f32 %v66, %v1260
    %v1262 = vand.u32 %v1261, 4294901760
    %v1263 = vsub.f32 %v1261, %v1262
    %v1264 = vand.u32 %v1263, 4294901760
    %1265 = vmatpush1.msra.mxu0 %v1264
    %1266 = vmatprep.subr.mxu0 0.0
    %v1267 = vand.u32 %v67, 4294901760
    %v1268 = vsub.f32 %v67, %v1267
    %v1269 = vand.u32 %v1268, 4294901760
    %v1270 = vsub.f32 %v1268, %v1269
    %v1271 = vand.u32 %v1270, 4294901760
    %1272 = vmatpush1.msra.mxu0 %v1271
    %1273 = vmatprep.subr.mxu0 0.0
    %v1274 = vand.u32 %v68, 4294901760
    %v1275 = vsub.f32 %v68, %v1274
    %v1276 = vand.u32 %v1275, 4294901760
    %v1277 = vsub.f32 %v1275, %v1276
    %v1278 = vand.u32 %v1277, 4294901760
    %1279 = vmatpush1.msra.mxu0 %v1278
    %1280 = vmatprep.subr.mxu0 0.0
    %v1281 = vand.u32 %v69, 4294901760
    %v1282 = vsub.f32 %v69, %v1281
    %v1283 = vand.u32 %v1282, 4294901760
    %v1284 = vsub.f32 %v1282, %v1283
    %v1285 = vand.u32 %v1284, 4294901760
    %1286 = vmatpush1.msra.mxu0 %v1285
    %1287 = vmatprep.subr.mxu0 0.0
    %v1288 = vand.u32 %v70, 4294901760
    %v1289 = vsub.f32 %v70, %v1288
    %v1290 = vand.u32 %v1289, 4294901760
    %v1291 = vsub.f32 %v1289, %v1290
    %v1292 = vand.u32 %v1291, 4294901760
    %1293 = vmatpush1.msra.mxu0 %v1292
    %1294 = vmatprep.subr.mxu0 0.0
    %v1295 = vand.u32 %v71, 4294901760
    %v1296 = vsub.f32 %v71, %v1295
    %v1297 = vand.u32 %v1296, 4294901760
    %v1298 = vsub.f32 %v1296, %v1297
    %v1299 = vand.u32 %v1298, 4294901760
    %1300 = vmatpush1.msra.mxu0 %v1299
    %1301 = vmatprep.subr.mxu0 0.0
    %v1302 = vand.u32 %v72, 4294901760
    %v1303 = vsub.f32 %v72, %v1302
    %v1304 = vand.u32 %v1303, 4294901760
    %v1305 = vsub.f32 %v1303, %v1304
    %v1306 = vand.u32 %v1305, 4294901760
    %1307 = vmatpush1.msra.mxu0 %v1306
    %1308 = vmatprep.subr.mxu0 0.0
    %v1309 = vand.u32 %v73, 4294901760
    %v1310 = vsub.f32 %v73, %v1309
    %v1311 = vand.u32 %v1310, 4294901760
    %v1312 = vsub.f32 %v1310, %v1311
    %v1313 = vand.u32 %v1312, 4294901760
    %1314 = vmatpush1.msra.mxu0 %v1313
    %1315 = vmatprep.subr.mxu0 0.0
    %v1316 = vand.u32 %v74, 4294901760
    %v1317 = vsub.f32 %v74, %v1316
    %v1318 = vand.u32 %v1317, 4294901760
    %v1319 = vsub.f32 %v1317, %v1318
    %v1320 = vand.u32 %v1319, 4294901760
    %1321 = vmatpush1.msra.mxu0 %v1320
    %1322 = vmatprep.subr.mxu0 0.0
    %v1323 = vand.u32 %v75, 4294901760
    %v1324 = vsub.f32 %v75, %v1323
    %v1325 = vand.u32 %v1324, 4294901760
    %v1326 = vsub.f32 %v1324, %v1325
    %v1327 = vand.u32 %v1326, 4294901760
    %1328 = vmatpush1.msra.mxu0 %v1327
    %1329 = vmatprep.subr.mxu0 0.0
    %v1330 = vand.u32 %v76, 4294901760
    %v1331 = vsub.f32 %v76, %v1330
    %v1332 = vand.u32 %v1331, 4294901760
    %v1333 = vsub.f32 %v1331, %v1332
    %v1334 = vand.u32 %v1333, 4294901760
    %1335 = vmatpush1.msra.mxu0 %v1334
    %1336 = vmatprep.subr.mxu0 0.0
    %v1337 = vand.u32 %v77, 4294901760
    %v1338 = vsub.f32 %v77, %v1337
    %v1339 = vand.u32 %v1338, 4294901760
    %v1340 = vsub.f32 %v1338, %v1339
    %v1341 = vand.u32 %v1340, 4294901760
    %1342 = vmatpush1.msra.mxu0 %v1341
    %1343 = vmatprep.subr.mxu0 0.0
    %v1344 = vand.u32 %v78, 4294901760
    %v1345 = vsub.f32 %v78, %v1344
    %v1346 = vand.u32 %v1345, 4294901760
    %v1347 = vsub.f32 %v1345, %v1346
    %v1348 = vand.u32 %v1347, 4294901760
    %1349 = vmatpush1.msra.mxu0 %v1348
    %1350 = vmatprep.subr.mxu0 0.0
    %v1351 = vand.u32 %v79, 4294901760
    %v1352 = vsub.f32 %v79, %v1351
    %v1353 = vand.u32 %v1352, 4294901760
    %v1354 = vsub.f32 %v1352, %v1353
    %v1355 = vand.u32 %v1354, 4294901760
    %1356 = vmatpush1.msra.mxu0 %v1355
    %1357 = vmatprep.subr.mxu0 0.0
    %v1358 = vand.u32 %v80, 4294901760
    %v1359 = vsub.f32 %v80, %v1358
    %v1360 = vand.u32 %v1359, 4294901760
    %v1361 = vsub.f32 %v1359, %v1360
    %v1362 = vand.u32 %v1361, 4294901760
    %1363 = vmatpush1.msra.mxu0 %v1362
    %v1364 = vand.u32 %v140, 4294901760
    %1365 = vmatprep.mubr.f32.mxu0 %v1364
    %v1366 = vand.u32 %v138, 4294901760
    %1367 = vmatmul.mubr.f32.gmra.mrb[0].mxu0 %v1366
    %v1368 = vpop.f32.mrb[0].mxu0
    %v1369 = vadd.f32 %v1137, %v1368
    %v1370 = vpop.f32.mrb[0].mxu0
    %1371 = vdwg.mxu0
    %1372 = vmatprep.subr.mxu0 0.0
    %v1373 = vand.u32 %v49, 4294901760
    %v1374 = vsub.f32 %v49, %v1373
    %1375 = vmatpush1.msra.mxu0 %v1374
    %1376 = vmatprep.subr.mxu0 0.0
    %v1377 = vand.u32 %v50, 4294901760
    %v1378 = vsub.f32 %v50, %v1377
    %1379 = vmatpush1.msra.mxu0 %v1378
    %1380 = vmatprep.subr.mxu0 0.0
    %v1381 = vand.u32 %v51, 4294901760
    %v1382 = vsub.f32 %v51, %v1381
    %1383 = vmatpush1.msra.mxu0 %v1382
    %1384 = vmatprep.subr.mxu0 0.0
    %v1385 = vand.u32 %v52, 4294901760
    %v1386 = vsub.f32 %v52, %v1385
    %1387 = vmatpush1.msra.mxu0 %v1386
    %1388 = vmatprep.subr.mxu0 0.0
    %v1389 = vand.u32 %v53, 4294901760
    %v1390 = vsub.f32 %v53, %v1389
    %1391 = vmatpush1.msra.mxu0 %v1390
    %1392 = vmatprep.subr.mxu0 0.0
    %v1393 = vand.u32 %v54, 4294901760
    %v1394 = vsub.f32 %v54, %v1393
    %1395 = vmatpush1.msra.mxu0 %v1394
    %1396 = vmatprep.subr.mxu0 0.0
    %v1397 = vand.u32 %v55, 4294901760
    %v1398 = vsub.f32 %v55, %v1397
    %1399 = vmatpush1.msra.mxu0 %v1398
    %1400 = vmatprep.subr.mxu0 0.0
    %v1401 = vand.u32 %v56, 4294901760
    %v1402 = vsub.f32 %v56, %v1401
    %1403 = vmatpush1.msra.mxu0 %v1402
    %1404 = vmatprep.subr.mxu0 0.0
    %v1405 = vand.u32 %v57, 4294901760
    %v1406 = vsub.f32 %v57, %v1405
    %1407 = vmatpush1.msra.mxu0 %v1406
    %1408 = vmatprep.subr.mxu0 0.0
    %v1409 = vand.u32 %v58, 4294901760
    %v1410 = vsub.f32 %v58, %v1409
    %1411 = vmatpush1.msra.mxu0 %v1410
    %1412 = vmatprep.subr.mxu0 0.0
    %v1413 = vand.u32 %v59, 4294901760
    %v1414 = vsub.f32 %v59, %v1413
    %1415 = vmatpush1.msra.mxu0 %v1414
    %1416 = vmatprep.subr.mxu0 0.0
    %v1417 = vand.u32 %v60, 4294901760
    %v1418 = vsub.f32 %v60, %v1417
    %1419 = vmatpush1.msra.mxu0 %v1418
    %1420 = vmatprep.subr.mxu0 0.0
    %v1421 = vand.u32 %v61, 4294901760
    %v1422 = vsub.f32 %v61, %v1421
    %1423 = vmatpush1.msra.mxu0 %v1422
    %1424 = vmatprep.subr.mxu0 0.0
    %v1425 = vand.u32 %v62, 4294901760
    %v1426 = vsub.f32 %v62, %v1425
    %1427 = vmatpush1.msra.mxu0 %v1426
    %1428 = vmatprep.subr.mxu0 0.0
    %v1429 = vand.u32 %v63, 4294901760
    %v1430 = vsub.f32 %v63, %v1429
    %1431 = vmatpush1.msra.mxu0 %v1430
    %1432 = vmatprep.subr.mxu0 0.0
    %v1433 = vand.u32 %v64, 4294901760
    %v1434 = vsub.f32 %v64, %v1433
    %1435 = vmatpush1.msra.mxu0 %v1434
    %1436 = vmatprep.subr.mxu0 0.0
    %v1437 = vand.u32 %v65, 4294901760
    %v1438 = vsub.f32 %v65, %v1437
    %1439 = vmatpush1.msra.mxu0 %v1438
    %1440 = vmatprep.subr.mxu0 0.0
    %v1441 = vand.u32 %v66, 4294901760
    %v1442 = vsub.f32 %v66, %v1441
    %1443 = vmatpush1.msra.mxu0 %v1442
    %1444 = vmatprep.subr.mxu0 0.0
    %v1445 = vand.u32 %v67, 4294901760
    %v1446 = vsub.f32 %v67, %v1445
    %1447 = vmatpush1.msra.mxu0 %v1446
    %1448 = vmatprep.subr.mxu0 0.0
    %v1449 = vand.u32 %v68, 4294901760
    %v1450 = vsub.f32 %v68, %v1449
    %1451 = vmatpush1.msra.mxu0 %v1450
    %1452 = vmatprep.subr.mxu0 0.0
    %v1453 = vand.u32 %v69, 4294901760
    %v1454 = vsub.f32 %v69, %v1453
    %1455 = vmatpush1.msra.mxu0 %v1454
    %1456 = vmatprep.subr.mxu0 0.0
    %v1457 = vand.u32 %v70, 4294901760
    %v1458 = vsub.f32 %v70, %v1457
    %1459 = vmatpush1.msra.mxu0 %v1458
    %1460 = vmatprep.subr.mxu0 0.0
    %v1461 = vand.u32 %v71, 4294901760
    %v1462 = vsub.f32 %v71, %v1461
    %1463 = vmatpush1.msra.mxu0 %v1462
    %1464 = vmatprep.subr.mxu0 0.0
    %v1465 = vand.u32 %v72, 4294901760
    %v1466 = vsub.f32 %v72, %v1465
    %1467 = vmatpush1.msra.mxu0 %v1466
    %1468 = vmatprep.subr.mxu0 0.0
    %v1469 = vand.u32 %v73, 4294901760
    %v1470 = vsub.f32 %v73, %v1469
    %1471 = vmatpush1.msra.mxu0 %v1470
    %1472 = vmatprep.subr.mxu0 0.0
    %v1473 = vand.u32 %v74, 4294901760
    %v1474 = vsub.f32 %v74, %v1473
    %1475 = vmatpush1.msra.mxu0 %v1474
    %1476 = vmatprep.subr.mxu0 0.0
    %v1477 = vand.u32 %v75, 4294901760
    %v1478 = vsub.f32 %v75, %v1477
    %1479 = vmatpush1.msra.mxu0 %v1478
    %1480 = vmatprep.subr.mxu0 0.0
    %v1481 = vand.u32 %v76, 4294901760
    %v1482 = vsub.f32 %v76, %v1481
    %1483 = vmatpush1.msra.mxu0 %v1482
    %1484 = vmatprep.subr.mxu0 0.0
    %v1485 = vand.u32 %v77, 4294901760
    %v1486 = vsub.f32 %v77, %v1485
    %1487 = vmatpush1.msra.mxu0 %v1486
    %1488 = vmatprep.subr.mxu0 0.0
    %v1489 = vand.u32 %v78, 4294901760
    %v1490 = vsub.f32 %v78, %v1489
    %1491 = vmatpush1.msra.mxu0 %v1490
    %1492 = vmatprep.subr.mxu0 0.0
    %v1493 = vand.u32 %v79, 4294901760
    %v1494 = vsub.f32 %v79, %v1493
    %1495 = vmatpush1.msra.mxu0 %v1494
    %1496 = vmatprep.subr.mxu0 0.0
    %v1497 = vand.u32 %v80, 4294901760
    %v1498 = vsub.f32 %v80, %v1497
    %1499 = vmatpush1.msra.mxu0 %v1498
    %v1500 = vand.u32 %v140, 4294901760
    %v1501 = vsub.f32 %v140, %v1500
    %1502 = vmatprep.mubr.f32.mxu0 %v1501
    %v1503 = vand.u32 %v138, 4294901760
    %v1504 = vsub.f32 %v138, %v1503
    %1505 = vmatmul.mubr.f32.gmra.mrb[0].mxu0 %v1504
    %v1506 = vpop.f32.mrb[0].mxu0
    %v1507 = vadd.f32 %v1369, %v1506
    %v1508 = vpop.f32.mrb[0].mxu0
    %1509 = vdwg.mxu0
    %1510 = vmatprep.subr.mxu0 0.0
    %v1511 = vand.u32 %v49, 4294901760
    %1512 = vmatpush1.msra.mxu0 %v1511
    %1513 = vmatprep.subr.mxu0 0.0
    %v1514 = vand.u32 %v50, 4294901760
    %1515 = vmatpush1.msra.mxu0 %v1514
    %1516 = vmatprep.subr.mxu0 0.0
    %v1517 = vand.u32 %v51, 4294901760
    %1518 = vmatpush1.msra.mxu0 %v1517
    %1519 = vmatprep.subr.mxu0 0.0
    %v1520 = vand.u32 %v52, 4294901760
    %1521 = vmatpush1.msra.mxu0 %v1520
    %1522 = vmatprep.subr.mxu0 0.0
    %v1523 = vand.u32 %v53, 4294901760
    %1524 = vmatpush1.msra.mxu0 %v1523
    %1525 = vmatprep.subr.mxu0 0.0
    %v1526 = vand.u32 %v54, 4294901760
    %1527 = vmatpush1.msra.mxu0 %v1526
    %1528 = vmatprep.subr.mxu0 0.0
    %v1529 = vand.u32 %v55, 4294901760
    %1530 = vmatpush1.msra.mxu0 %v1529
    %1531 = vmatprep.subr.mxu0 0.0
    %v1532 = vand.u32 %v56, 4294901760
    %1533 = vmatpush1.msra.mxu0 %v1532
    %1534 = vmatprep.subr.mxu0 0.0
    %v1535 = vand.u32 %v57, 4294901760
    %1536 = vmatpush1.msra.mxu0 %v1535
    %1537 = vmatprep.subr.mxu0 0.0
    %v1538 = vand.u32 %v58, 4294901760
    %1539 = vmatpush1.msra.mxu0 %v1538
    %1540 = vmatprep.subr.mxu0 0.0
    %v1541 = vand.u32 %v59, 4294901760
    %1542 = vmatpush1.msra.mxu0 %v1541
    %1543 = vmatprep.subr.mxu0 0.0
    %v1544 = vand.u32 %v60, 4294901760
    %1545 = vmatpush1.msra.mxu0 %v1544
    %1546 = vmatprep.subr.mxu0 0.0
    %v1547 = vand.u32 %v61, 4294901760
    %1548 = vmatpush1.msra.mxu0 %v1547
    %1549 = vmatprep.subr.mxu0 0.0
    %v1550 = vand.u32 %v62, 4294901760
    %1551 = vmatpush1.msra.mxu0 %v1550
    %1552 = vmatprep.subr.mxu0 0.0
    %v1553 = vand.u32 %v63, 4294901760
    %1554 = vmatpush1.msra.mxu0 %v1553
    %1555 = vmatprep.subr.mxu0 0.0
    %v1556 = vand.u32 %v64, 4294901760
    %1557 = vmatpush1.msra.mxu0 %v1556
    %1558 = vmatprep.subr.mxu0 0.0
    %v1559 = vand.u32 %v65, 4294901760
    %1560 = vmatpush1.msra.mxu0 %v1559
    %1561 = vmatprep.subr.mxu0 0.0
    %v1562 = vand.u32 %v66, 4294901760
    %1563 = vmatpush1.msra.mxu0 %v1562
    %1564 = vmatprep.subr.mxu0 0.0
    %v1565 = vand.u32 %v67, 4294901760
    %1566 = vmatpush1.msra.mxu0 %v1565
    %1567 = vmatprep.subr.mxu0 0.0
    %v1568 = vand.u32 %v68, 4294901760
    %1569 = vmatpush1.msra.mxu0 %v1568
    %1570 = vmatprep.subr.mxu0 0.0
    %v1571 = vand.u32 %v69, 4294901760
    %1572 = vmatpush1.msra.mxu0 %v1571
    %1573 = vmatprep.subr.mxu0 0.0
    %v1574 = vand.u32 %v70, 4294901760
    %1575 = vmatpush1.msra.mxu0 %v1574
    %1576 = vmatprep.subr.mxu0 0.0
    %v1577 = vand.u32 %v71, 4294901760
    %1578 = vmatpush1.msra.mxu0 %v1577
    %1579 = vmatprep.subr.mxu0 0.0
    %v1580 = vand.u32 %v72, 4294901760
    %1581 = vmatpush1.msra.mxu0 %v1580
    %1582 = vmatprep.subr.mxu0 0.0
    %v1583 = vand.u32 %v73, 4294901760
    %1584 = vmatpush1.msra.mxu0 %v1583
    %1585 = vmatprep.subr.mxu0 0.0
    %v1586 = vand.u32 %v74, 4294901760
    %1587 = vmatpush1.msra.mxu0 %v1586
    %1588 = vmatprep.subr.mxu0 0.0
    %v1589 = vand.u32 %v75, 4294901760
    %1590 = vmatpush1.msra.mxu0 %v1589
    %1591 = vmatprep.subr.mxu0 0.0
    %v1592 = vand.u32 %v76, 4294901760
    %1593 = vmatpush1.msra.mxu0 %v1592
    %1594 = vmatprep.subr.mxu0 0.0
    %v1595 = vand.u32 %v77, 4294901760
    %1596 = vmatpush1.msra.mxu0 %v1595
    %1597 = vmatprep.subr.mxu0 0.0
    %v1598 = vand.u32 %v78, 4294901760
    %1599 = vmatpush1.msra.mxu0 %v1598
    %1600 = vmatprep.subr.mxu0 0.0
    %v1601 = vand.u32 %v79, 4294901760
    %1602 = vmatpush1.msra.mxu0 %v1601
    %1603 = vmatprep.subr.mxu0 0.0
    %v1604 = vand.u32 %v80, 4294901760
    %1605 = vmatpush1.msra.mxu0 %v1604
    %v1606 = vand.u32 %v140, 4294901760
    %v1607 = vsub.f32 %v140, %v1606
    %v1608 = vand.u32 %v1607, 4294901760
    %1609 = vmatprep.mubr.f32.mxu0 %v1608
    %v1610 = vand.u32 %v138, 4294901760
    %v1611 = vsub.f32 %v138, %v1610
    %v1612 = vand.u32 %v1611, 4294901760
    %1613 = vmatmul.mubr.f32.gmra.mrb[0].mxu0 %v1612
    %v1614 = vpop.f32.mrb[0].mxu0
    %v1615 = vadd.f32 %v1507, %v1614
    %v1616 = vpop.f32.mrb[0].mxu0
    %1617 = vdwg.mxu0
    %1618 = vmatprep.subr.mxu0 0.0
    %v1619 = vand.u32 %v49, 4294901760
    %v1620 = vsub.f32 %v49, %v1619
    %v1621 = vand.u32 %v1620, 4294901760
    %1622 = vmatpush1.msra.mxu0 %v1621
    %1623 = vmatprep.subr.mxu0 0.0
    %v1624 = vand.u32 %v50, 4294901760
    %v1625 = vsub.f32 %v50, %v1624
    %v1626 = vand.u32 %v1625, 4294901760
    %1627 = vmatpush1.msra.mxu0 %v1626
    %1628 = vmatprep.subr.mxu0 0.0
    %v1629 = vand.u32 %v51, 4294901760
    %v1630 = vsub.f32 %v51, %v1629
    %v1631 = vand.u32 %v1630, 4294901760
    %1632 = vmatpush1.msra.mxu0 %v1631
    %1633 = vmatprep.subr.mxu0 0.0
    %v1634 = vand.u32 %v52, 4294901760
    %v1635 = vsub.f32 %v52, %v1634
    %v1636 = vand.u32 %v1635, 4294901760
    %1637 = vmatpush1.msra.mxu0 %v1636
    %1638 = vmatprep.subr.mxu0 0.0
    %v1639 = vand.u32 %v53, 4294901760
    %v1640 = vsub.f32 %v53, %v1639
    %v1641 = vand.u32 %v1640, 4294901760
    %1642 = vmatpush1.msra.mxu0 %v1641
    %1643 = vmatprep.subr.mxu0 0.0
    %v1644 = vand.u32 %v54, 4294901760
    %v1645 = vsub.f32 %v54, %v1644
    %v1646 = vand.u32 %v1645, 4294901760
    %1647 = vmatpush1.msra.mxu0 %v1646
    %1648 = vmatprep.subr.mxu0 0.0
    %v1649 = vand.u32 %v55, 4294901760
    %v1650 = vsub.f32 %v55, %v1649
    %v1651 = vand.u32 %v1650, 4294901760
    %1652 = vmatpush1.msra.mxu0 %v1651
    %1653 = vmatprep.subr.mxu0 0.0
    %v1654 = vand.u32 %v56, 4294901760
    %v1655 = vsub.f32 %v56, %v1654
    %v1656 = vand.u32 %v1655, 4294901760
    %1657 = vmatpush1.msra.mxu0 %v1656
    %1658 = vmatprep.subr.mxu0 0.0
    %v1659 = vand.u32 %v57, 4294901760
    %v1660 = vsub.f32 %v57, %v1659
    %v1661 = vand.u32 %v1660, 4294901760
    %1662 = vmatpush1.msra.mxu0 %v1661
    %1663 = vmatprep.subr.mxu0 0.0
    %v1664 = vand.u32 %v58, 4294901760
    %v1665 = vsub.f32 %v58, %v1664
    %v1666 = vand.u32 %v1665, 4294901760
    %1667 = vmatpush1.msra.mxu0 %v1666
    %1668 = vmatprep.subr.mxu0 0.0
    %v1669 = vand.u32 %v59, 4294901760
    %v1670 = vsub.f32 %v59, %v1669
    %v1671 = vand.u32 %v1670, 4294901760
    %1672 = vmatpush1.msra.mxu0 %v1671
    %1673 = vmatprep.subr.mxu0 0.0
    %v1674 = vand.u32 %v60, 4294901760
    %v1675 = vsub.f32 %v60, %v1674
    %v1676 = vand.u32 %v1675, 4294901760
    %1677 = vmatpush1.msra.mxu0 %v1676
    %1678 = vmatprep.subr.mxu0 0.0
    %v1679 = vand.u32 %v61, 4294901760
    %v1680 = vsub.f32 %v61, %v1679
    %v1681 = vand.u32 %v1680, 4294901760
    %1682 = vmatpush1.msra.mxu0 %v1681
    %1683 = vmatprep.subr.mxu0 0.0
    %v1684 = vand.u32 %v62, 4294901760
    %v1685 = vsub.f32 %v62, %v1684
    %v1686 = vand.u32 %v1685, 4294901760
    %1687 = vmatpush1.msra.mxu0 %v1686
    %1688 = vmatprep.subr.mxu0 0.0
    %v1689 = vand.u32 %v63, 4294901760
    %v1690 = vsub.f32 %v63, %v1689
    %v1691 = vand.u32 %v1690, 4294901760
    %1692 = vmatpush1.msra.mxu0 %v1691
    %1693 = vmatprep.subr.mxu0 0.0
    %v1694 = vand.u32 %v64, 4294901760
    %v1695 = vsub.f32 %v64, %v1694
    %v1696 = vand.u32 %v1695, 4294901760
    %1697 = vmatpush1.msra.mxu0 %v1696
    %1698 = vmatprep.subr.mxu0 0.0
    %v1699 = vand.u32 %v65, 4294901760
    %v1700 = vsub.f32 %v65, %v1699
    %v1701 = vand.u32 %v1700, 4294901760
    %1702 = vmatpush1.msra.mxu0 %v1701
    %1703 = vmatprep.subr.mxu0 0.0
    %v1704 = vand.u32 %v66, 4294901760
    %v1705 = vsub.f32 %v66, %v1704
    %v1706 = vand.u32 %v1705, 4294901760
    %1707 = vmatpush1.msra.mxu0 %v1706
    %1708 = vmatprep.subr.mxu0 0.0
    %v1709 = vand.u32 %v67, 4294901760
    %v1710 = vsub.f32 %v67, %v1709
    %v1711 = vand.u32 %v1710, 4294901760
    %1712 = vmatpush1.msra.mxu0 %v1711
    %1713 = vmatprep.subr.mxu0 0.0
    %v1714 = vand.u32 %v68, 4294901760
    %v1715 = vsub.f32 %v68, %v1714
    %v1716 = vand.u32 %v1715, 4294901760
    %1717 = vmatpush1.msra.mxu0 %v1716
    %1718 = vmatprep.subr.mxu0 0.0
    %v1719 = vand.u32 %v69, 4294901760
    %v1720 = vsub.f32 %v69, %v1719
    %v1721 = vand.u32 %v1720, 4294901760
    %1722 = vmatpush1.msra.mxu0 %v1721
    %1723 = vmatprep.subr.mxu0 0.0
    %v1724 = vand.u32 %v70, 4294901760
    %v1725 = vsub.f32 %v70, %v1724
    %v1726 = vand.u32 %v1725, 4294901760
    %1727 = vmatpush1.msra.mxu0 %v1726
    %1728 = vmatprep.subr.mxu0 0.0
    %v1729 = vand.u32 %v71, 4294901760
    %v1730 = vsub.f32 %v71, %v1729
    %v1731 = vand.u32 %v1730, 4294901760
    %1732 = vmatpush1.msra.mxu0 %v1731
    %1733 = vmatprep.subr.mxu0 0.0
    %v1734 = vand.u32 %v72, 4294901760
    %v1735 = vsub.f32 %v72, %v1734
    %v1736 = vand.u32 %v1735, 4294901760
    %1737 = vmatpush1.msra.mxu0 %v1736
    %1738 = vmatprep.subr.mxu0 0.0
    %v1739 = vand.u32 %v73, 4294901760
    %v1740 = vsub.f32 %v73, %v1739
    %v1741 = vand.u32 %v1740, 4294901760
    %1742 = vmatpush1.msra.mxu0 %v1741
    %1743 = vmatprep.subr.mxu0 0.0
    %v1744 = vand.u32 %v74, 4294901760
    %v1745 = vsub.f32 %v74, %v1744
    %v1746 = vand.u32 %v1745, 4294901760
    %1747 = vmatpush1.msra.mxu0 %v1746
    %1748 = vmatprep.subr.mxu0 0.0
    %v1749 = vand.u32 %v75, 4294901760
    %v1750 = vsub.f32 %v75, %v1749
    %v1751 = vand.u32 %v1750, 4294901760
    %1752 = vmatpush1.msra.mxu0 %v1751
    %1753 = vmatprep.subr.mxu0 0.0
    %v1754 = vand.u32 %v76, 4294901760
    %v1755 = vsub.f32 %v76, %v1754
    %v1756 = vand.u32 %v1755, 4294901760
    %1757 = vmatpush1.msra.mxu0 %v1756
    %1758 = vmatprep.subr.mxu0 0.0
    %v1759 = vand.u32 %v77, 4294901760
    %v1760 = vsub.f32 %v77, %v1759
    %v1761 = vand.u32 %v1760, 4294901760
    %1762 = vmatpush1.msra.mxu0 %v1761
    %1763 = vmatprep.subr.mxu0 0.0
    %v1764 = vand.u32 %v78, 4294901760
    %v1765 = vsub.f32 %v78, %v1764
    %v1766 = vand.u32 %v1765, 4294901760
    %1767 = vmatpush1.msra.mxu0 %v1766
    %1768 = vmatprep.subr.mxu0 0.0
    %v1769 = vand.u32 %v79, 4294901760
    %v1770 = vsub.f32 %v79, %v1769
    %v1771 = vand.u32 %v1770, 4294901760
    %1772 = vmatpush1.msra.mxu0 %v1771
    %1773 = vmatprep.subr.mxu0 0.0
    %v1774 = vand.u32 %v80, 4294901760
    %v1775 = vsub.f32 %v80, %v1774
    %v1776 = vand.u32 %v1775, 4294901760
    %1777 = vmatpush1.msra.mxu0 %v1776
    %v1778 = vand.u32 %v140, 4294901760
    %1779 = vmatprep.mubr.f32.mxu0 %v1778
    %v1780 = vand.u32 %v138, 4294901760
    %1781 = vmatmul.mubr.f32.gmra.mrb[0].mxu0 %v1780
    %v1782 = vpop.f32.mrb[0].mxu0
    %v1783 = vadd.f32 %v1615, %v1782
    %v1784 = vpop.f32.mrb[0].mxu0
    %1785 = vdwg.mxu0
    %1786 = vmatprep.subr.mxu0 0.0
    %v1787 = vand.u32 %v49, 4294901760
    %1788 = vmatpush1.msra.mxu0 %v1787
    %1789 = vmatprep.subr.mxu0 0.0
    %v1790 = vand.u32 %v50, 4294901760
    %1791 = vmatpush1.msra.mxu0 %v1790
    %1792 = vmatprep.subr.mxu0 0.0
    %v1793 = vand.u32 %v51, 4294901760
    %1794 = vmatpush1.msra.mxu0 %v1793
    %1795 = vmatprep.subr.mxu0 0.0
    %v1796 = vand.u32 %v52, 4294901760
    %1797 = vmatpush1.msra.mxu0 %v1796
    %1798 = vmatprep.subr.mxu0 0.0
    %v1799 = vand.u32 %v53, 4294901760
    %1800 = vmatpush1.msra.mxu0 %v1799
    %1801 = vmatprep.subr.mxu0 0.0
    %v1802 = vand.u32 %v54, 4294901760
    %1803 = vmatpush1.msra.mxu0 %v1802
    %1804 = vmatprep.subr.mxu0 0.0
    %v1805 = vand.u32 %v55, 4294901760
    %1806 = vmatpush1.msra.mxu0 %v1805
    %1807 = vmatprep.subr.mxu0 0.0
    %v1808 = vand.u32 %v56, 4294901760
    %1809 = vmatpush1.msra.mxu0 %v1808
    %1810 = vmatprep.subr.mxu0 0.0
    %v1811 = vand.u32 %v57, 4294901760
    %1812 = vmatpush1.msra.mxu0 %v1811
    %1813 = vmatprep.subr.mxu0 0.0
    %v1814 = vand.u32 %v58, 4294901760
    %1815 = vmatpush1.msra.mxu0 %v1814
    %1816 = vmatprep.subr.mxu0 0.0
    %v1817 = vand.u32 %v59, 4294901760
    %1818 = vmatpush1.msra.mxu0 %v1817
    %1819 = vmatprep.subr.mxu0 0.0
    %v1820 = vand.u32 %v60, 4294901760
    %1821 = vmatpush1.msra.mxu0 %v1820
    %1822 = vmatprep.subr.mxu0 0.0
    %v1823 = vand.u32 %v61, 4294901760
    %1824 = vmatpush1.msra.mxu0 %v1823
    %1825 = vmatprep.subr.mxu0 0.0
    %v1826 = vand.u32 %v62, 4294901760
    %1827 = vmatpush1.msra.mxu0 %v1826
    %1828 = vmatprep.subr.mxu0 0.0
    %v1829 = vand.u32 %v63, 4294901760
    %1830 = vmatpush1.msra.mxu0 %v1829
    %1831 = vmatprep.subr.mxu0 0.0
    %v1832 = vand.u32 %v64, 4294901760
    %1833 = vmatpush1.msra.mxu0 %v1832
    %1834 = vmatprep.subr.mxu0 0.0
    %v1835 = vand.u32 %v65, 4294901760
    %1836 = vmatpush1.msra.mxu0 %v1835
    %1837 = vmatprep.subr.mxu0 0.0
    %v1838 = vand.u32 %v66, 4294901760
    %1839 = vmatpush1.msra.mxu0 %v1838
    %1840 = vmatprep.subr.mxu0 0.0
    %v1841 = vand.u32 %v67, 4294901760
    %1842 = vmatpush1.msra.mxu0 %v1841
    %1843 = vmatprep.subr.mxu0 0.0
    %v1844 = vand.u32 %v68, 4294901760
    %1845 = vmatpush1.msra.mxu0 %v1844
    %1846 = vmatprep.subr.mxu0 0.0
    %v1847 = vand.u32 %v69, 4294901760
    %1848 = vmatpush1.msra.mxu0 %v1847
    %1849 = vmatprep.subr.mxu0 0.0
    %v1850 = vand.u32 %v70, 4294901760
    %1851 = vmatpush1.msra.mxu0 %v1850
    %1852 = vmatprep.subr.mxu0 0.0
    %v1853 = vand.u32 %v71, 4294901760
    %1854 = vmatpush1.msra.mxu0 %v1853
    %1855 = vmatprep.subr.mxu0 0.0
    %v1856 = vand.u32 %v72, 4294901760
    %1857 = vmatpush1.msra.mxu0 %v1856
    %1858 = vmatprep.subr.mxu0 0.0
    %v1859 = vand.u32 %v73, 4294901760
    %1860 = vmatpush1.msra.mxu0 %v1859
    %1861 = vmatprep.subr.mxu0 0.0
    %v1862 = vand.u32 %v74, 4294901760
    %1863 = vmatpush1.msra.mxu0 %v1862
    %1864 = vmatprep.subr.mxu0 0.0
    %v1865 = vand.u32 %v75, 4294901760
    %1866 = vmatpush1.msra.mxu0 %v1865
    %1867 = vmatprep.subr.mxu0 0.0
    %v1868 = vand.u32 %v76, 4294901760
    %1869 = vmatpush1.msra.mxu0 %v1868
    %1870 = vmatprep.subr.mxu0 0.0
    %v1871 = vand.u32 %v77, 4294901760
    %1872 = vmatpush1.msra.mxu0 %v1871
    %1873 = vmatprep.subr.mxu0 0.0
    %v1874 = vand.u32 %v78, 4294901760
    %1875 = vmatpush1.msra.mxu0 %v1874
    %1876 = vmatprep.subr.mxu0 0.0
    %v1877 = vand.u32 %v79, 4294901760
    %1878 = vmatpush1.msra.mxu0 %v1877
    %1879 = vmatprep.subr.mxu0 0.0
    %v1880 = vand.u32 %v80, 4294901760
    %1881 = vmatpush1.msra.mxu0 %v1880
    %v1882 = vand.u32 %v140, 4294901760
    %1883 = vmatprep.mubr.f32.mxu0 %v1882
    %v1884 = vand.u32 %v138, 4294901760
    %1885 = vmatmul.mubr.f32.gmra.mrb[0].mxu0 %v1884
    %v1886 = vpop.f32.mrb[0].mxu0
    %v1887 = vadd.f32 %v1783, %v1886
    %v1888 = vpop.f32.mrb[0].mxu0
    %1889 = vdwg.mxu0
    %1890 = vmatprep.subr.mxu0 0.0
    %v1891 = vand.u32 %v81, 4294901760
    %1892 = vmatpush1.msra.mxu0 %v1891
    %1893 = vmatprep.subr.mxu0 0.0
    %v1894 = vand.u32 %v82, 4294901760
    %1895 = vmatpush1.msra.mxu0 %v1894
    %1896 = vmatprep.subr.mxu0 0.0
    %v1897 = vand.u32 %v83, 4294901760
    %1898 = vmatpush1.msra.mxu0 %v1897
    %1899 = vmatprep.subr.mxu0 0.0
    %v1900 = vand.u32 %v84, 4294901760
    %1901 = vmatpush1.msra.mxu0 %v1900
    %1902 = vmatprep.subr.mxu0 0.0
    %v1903 = vand.u32 %v85, 4294901760
    %1904 = vmatpush1.msra.mxu0 %v1903
    %1905 = vmatprep.subr.mxu0 0.0
    %v1906 = vand.u32 %v86, 4294901760
    %1907 = vmatpush1.msra.mxu0 %v1906
    %1908 = vmatprep.subr.mxu0 0.0
    %v1909 = vand.u32 %v87, 4294901760
    %1910 = vmatpush1.msra.mxu0 %v1909
    %1911 = vmatprep.subr.mxu0 0.0
    %v1912 = vand.u32 %v88, 4294901760
    %1913 = vmatpush1.msra.mxu0 %v1912
    %1914 = vmatprep.subr.mxu0 0.0
    %v1915 = vand.u32 %v89, 4294901760
    %1916 = vmatpush1.msra.mxu0 %v1915
    %1917 = vmatprep.subr.mxu0 0.0
    %v1918 = vand.u32 %v90, 4294901760
    %1919 = vmatpush1.msra.mxu0 %v1918
    %1920 = vmatprep.subr.mxu0 0.0
    %v1921 = vand.u32 %v91, 4294901760
    %1922 = vmatpush1.msra.mxu0 %v1921
    %1923 = vmatprep.subr.mxu0 0.0
    %v1924 = vand.u32 %v92, 4294901760
    %1925 = vmatpush1.msra.mxu0 %v1924
    %1926 = vmatprep.subr.mxu0 0.0
    %v1927 = vand.u32 %v93, 4294901760
    %1928 = vmatpush1.msra.mxu0 %v1927
    %1929 = vmatprep.subr.mxu0 0.0
    %v1930 = vand.u32 %v94, 4294901760
    %1931 = vmatpush1.msra.mxu0 %v1930
    %1932 = vmatprep.subr.mxu0 0.0
    %v1933 = vand.u32 %v95, 4294901760
    %1934 = vmatpush1.msra.mxu0 %v1933
    %1935 = vmatprep.subr.mxu0 0.0
    %v1936 = vand.u32 %v96, 4294901760
    %1937 = vmatpush1.msra.mxu0 %v1936
    %1938 = vmatprep.subr.mxu0 0.0
    %v1939 = vand.u32 %v97, 4294901760
    %1940 = vmatpush1.msra.mxu0 %v1939
    %1941 = vmatprep.subr.mxu0 0.0
    %v1942 = vand.u32 %v98, 4294901760
    %1943 = vmatpush1.msra.mxu0 %v1942
    %1944 = vmatprep.subr.mxu0 0.0
    %v1945 = vand.u32 %v99, 4294901760
    %1946 = vmatpush1.msra.mxu0 %v1945
    %1947 = vmatprep.subr.mxu0 0.0
    %v1948 = vand.u32 %v100, 4294901760
    %1949 = vmatpush1.msra.mxu0 %v1948
    %1950 = vmatprep.subr.mxu0 0.0
    %v1951 = vand.u32 %v101, 4294901760
    %1952 = vmatpush1.msra.mxu0 %v1951
    %1953 = vmatprep.subr.mxu0 0.0
    %v1954 = vand.u32 %v102, 4294901760
    %1955 = vmatpush1.msra.mxu0 %v1954
    %1956 = vmatprep.subr.mxu0 0.0
    %v1957 = vand.u32 %v103, 4294901760
    %1958 = vmatpush1.msra.mxu0 %v1957
    %1959 = vmatprep.subr.mxu0 0.0
    %v1960 = vand.u32 %v104, 4294901760
    %1961 = vmatpush1.msra.mxu0 %v1960
    %1962 = vmatprep.subr.mxu0 0.0
    %v1963 = vand.u32 %v105, 4294901760
    %1964 = vmatpush1.msra.mxu0 %v1963
    %1965 = vmatprep.subr.mxu0 0.0
    %v1966 = vand.u32 %v106, 4294901760
    %1967 = vmatpush1.msra.mxu0 %v1966
    %1968 = vmatprep.subr.mxu0 0.0
    %v1969 = vand.u32 %v107, 4294901760
    %1970 = vmatpush1.msra.mxu0 %v1969
    %1971 = vmatprep.subr.mxu0 0.0
    %v1972 = vand.u32 %v108, 4294901760
    %1973 = vmatpush1.msra.mxu0 %v1972
    %1974 = vmatprep.subr.mxu0 0.0
    %v1975 = vand.u32 %v109, 4294901760
    %1976 = vmatpush1.msra.mxu0 %v1975
    %1977 = vmatprep.subr.mxu0 0.0
    %v1978 = vand.u32 %v110, 4294901760
    %1979 = vmatpush1.msra.mxu0 %v1978
    %1980 = vmatprep.subr.mxu0 0.0
    %v1981 = vand.u32 %v111, 4294901760
    %1982 = vmatpush1.msra.mxu0 %v1981
    %1983 = vmatprep.subr.mxu0 0.0
    %v1984 = vand.u32 %v112, 4294901760
    %1985 = vmatpush1.msra.mxu0 %v1984
    %v1986 = vand.u32 %v156, 4294901760
    %v1987 = vsub.f32 %v156, %v1986
    %v1988 = vand.u32 %v1987, 4294901760
    %v1989 = vsub.f32 %v1987, %v1988
    %v1990 = vand.u32 %v1989, 4294901760
    %1991 = vmatprep.mubr.f32.mxu0 %v1990
    %v1992 = vand.u32 %v148, 4294901760
    %v1993 = vsub.f32 %v148, %v1992
    %v1994 = vand.u32 %v1993, 4294901760
    %v1995 = vsub.f32 %v1993, %v1994
    %v1996 = vand.u32 %v1995, 4294901760
    %1997 = vmatmul.mubr.f32.gmra.mrb[0].mxu0 %v1996
    %v1998 = vpop.f32.mrb[0].mxu0
    %v1999 = vadd.f32 %v1887, %v1998
    %v2000 = vpop.f32.mrb[0].mxu0
    %2001 = vdwg.mxu0
    %2002 = vmatprep.subr.mxu0 0.0
    %v2003 = vand.u32 %v81, 4294901760
    %v2004 = vsub.f32 %v81, %v2003
    %v2005 = vand.u32 %v2004, 4294901760
    %v2006 = vsub.f32 %v2004, %v2005
    %v2007 = vand.u32 %v2006, 4294901760
    %2008 = vmatpush1.msra.mxu0 %v2007
    %2009 = vmatprep.subr.mxu0 0.0
    %v2010 = vand.u32 %v82, 4294901760
    %v2011 = vsub.f32 %v82, %v2010
    %v2012 = vand.u32 %v2011, 4294901760
    %v2013 = vsub.f32 %v2011, %v2012
    %v2014 = vand.u32 %v2013, 4294901760
    %2015 = vmatpush1.msra.mxu0 %v2014
    %2016 = vmatprep.subr.mxu0 0.0
    %v2017 = vand.u32 %v83, 4294901760
    %v2018 = vsub.f32 %v83, %v2017
    %v2019 = vand.u32 %v2018, 4294901760
    %v2020 = vsub.f32 %v2018, %v2019
    %v2021 = vand.u32 %v2020, 4294901760
    %2022 = vmatpush1.msra.mxu0 %v2021
    %2023 = vmatprep.subr.mxu0 0.0
    %v2024 = vand.u32 %v84, 4294901760
    %v2025 = vsub.f32 %v84, %v2024
    %v2026 = vand.u32 %v2025, 4294901760
    %v2027 = vsub.f32 %v2025, %v2026
    %v2028 = vand.u32 %v2027, 4294901760
    %2029 = vmatpush1.msra.mxu0 %v2028
    %2030 = vmatprep.subr.mxu0 0.0
    %v2031 = vand.u32 %v85, 4294901760
    %v2032 = vsub.f32 %v85, %v2031
    %v2033 = vand.u32 %v2032, 4294901760
    %v2034 = vsub.f32 %v2032, %v2033
    %v2035 = vand.u32 %v2034, 4294901760
    %2036 = vmatpush1.msra.mxu0 %v2035
    %2037 = vmatprep.subr.mxu0 0.0
    %v2038 = vand.u32 %v86, 4294901760
    %v2039 = vsub.f32 %v86, %v2038
    %v2040 = vand.u32 %v2039, 4294901760
    %v2041 = vsub.f32 %v2039, %v2040
    %v2042 = vand.u32 %v2041, 4294901760
    %2043 = vmatpush1.msra.mxu0 %v2042
    %2044 = vmatprep.subr.mxu0 0.0
    %v2045 = vand.u32 %v87, 4294901760
    %v2046 = vsub.f32 %v87, %v2045
    %v2047 = vand.u32 %v2046, 4294901760
    %v2048 = vsub.f32 %v2046, %v2047
    %v2049 = vand.u32 %v2048, 4294901760
    %2050 = vmatpush1.msra.mxu0 %v2049
    %2051 = vmatprep.subr.mxu0 0.0
    %v2052 = vand.u32 %v88, 4294901760
    %v2053 = vsub.f32 %v88, %v2052
    %v2054 = vand.u32 %v2053, 4294901760
    %v2055 = vsub.f32 %v2053, %v2054
    %v2056 = vand.u32 %v2055, 4294901760
    %2057 = vmatpush1.msra.mxu0 %v2056
    %2058 = vmatprep.subr.mxu0 0.0
    %v2059 = vand.u32 %v89, 4294901760
    %v2060 = vsub.f32 %v89, %v2059
    %v2061 = vand.u32 %v2060, 4294901760
    %v2062 = vsub.f32 %v2060, %v2061
    %v2063 = vand.u32 %v2062, 4294901760
    %2064 = vmatpush1.msra.mxu0 %v2063
    %2065 = vmatprep.subr.mxu0 0.0
    %v2066 = vand.u32 %v90, 4294901760
    %v2067 = vsub.f32 %v90, %v2066
    %v2068 = vand.u32 %v2067, 4294901760
    %v2069 = vsub.f32 %v2067, %v2068
    %v2070 = vand.u32 %v2069, 4294901760
    %2071 = vmatpush1.msra.mxu0 %v2070
    %2072 = vmatprep.subr.mxu0 0.0
    %v2073 = vand.u32 %v91, 4294901760
    %v2074 = vsub.f32 %v91, %v2073
    %v2075 = vand.u32 %v2074, 4294901760
    %v2076 = vsub.f32 %v2074, %v2075
    %v2077 = vand.u32 %v2076, 4294901760
    %2078 = vmatpush1.msra.mxu0 %v2077
    %2079 = vmatprep.subr.mxu0 0.0
    %v2080 = vand.u32 %v92, 4294901760
    %v2081 = vsub.f32 %v92, %v2080
    %v2082 = vand.u32 %v2081, 4294901760
    %v2083 = vsub.f32 %v2081, %v2082
    %v2084 = vand.u32 %v2083, 4294901760
    %2085 = vmatpush1.msra.mxu0 %v2084
    %2086 = vmatprep.subr.mxu0 0.0
    %v2087 = vand.u32 %v93, 4294901760
    %v2088 = vsub.f32 %v93, %v2087
    %v2089 = vand.u32 %v2088, 4294901760
    %v2090 = vsub.f32 %v2088, %v2089
    %v2091 = vand.u32 %v2090, 4294901760
    %2092 = vmatpush1.msra.mxu0 %v2091
    %2093 = vmatprep.subr.mxu0 0.0
    %v2094 = vand.u32 %v94, 4294901760
    %v2095 = vsub.f32 %v94, %v2094
    %v2096 = vand.u32 %v2095, 4294901760
    %v2097 = vsub.f32 %v2095, %v2096
    %v2098 = vand.u32 %v2097, 4294901760
    %2099 = vmatpush1.msra.mxu0 %v2098
    %2100 = vmatprep.subr.mxu0 0.0
    %v2101 = vand.u32 %v95, 4294901760
    %v2102 = vsub.f32 %v95, %v2101
    %v2103 = vand.u32 %v2102, 4294901760
    %v2104 = vsub.f32 %v2102, %v2103
    %v2105 = vand.u32 %v2104, 4294901760
    %2106 = vmatpush1.msra.mxu0 %v2105
    %2107 = vmatprep.subr.mxu0 0.0
    %v2108 = vand.u32 %v96, 4294901760
    %v2109 = vsub.f32 %v96, %v2108
    %v2110 = vand.u32 %v2109, 4294901760
    %v2111 = vsub.f32 %v2109, %v2110
    %v2112 = vand.u32 %v2111, 4294901760
    %2113 = vmatpush1.msra.mxu0 %v2112
    %2114 = vmatprep.subr.mxu0 0.0
    %v2115 = vand.u32 %v97, 4294901760
    %v2116 = vsub.f32 %v97, %v2115
    %v2117 = vand.u32 %v2116, 4294901760
    %v2118 = vsub.f32 %v2116, %v2117
    %v2119 = vand.u32 %v2118, 4294901760
    %2120 = vmatpush1.msra.mxu0 %v2119
    %2121 = vmatprep.subr.mxu0 0.0
    %v2122 = vand.u32 %v98, 4294901760
    %v2123 = vsub.f32 %v98, %v2122
    %v2124 = vand.u32 %v2123, 4294901760
    %v2125 = vsub.f32 %v2123, %v2124
    %v2126 = vand.u32 %v2125, 4294901760
    %2127 = vmatpush1.msra.mxu0 %v2126
    %2128 = vmatprep.subr.mxu0 0.0
    %v2129 = vand.u32 %v99, 4294901760
    %v2130 = vsub.f32 %v99, %v2129
    %v2131 = vand.u32 %v2130, 4294901760
    %v2132 = vsub.f32 %v2130, %v2131
    %v2133 = vand.u32 %v2132, 4294901760
    %2134 = vmatpush1.msra.mxu0 %v2133
    %2135 = vmatprep.subr.mxu0 0.0
    %v2136 = vand.u32 %v100, 4294901760
    %v2137 = vsub.f32 %v100, %v2136
    %v2138 = vand.u32 %v2137, 4294901760
    %v2139 = vsub.f32 %v2137, %v2138
    %v2140 = vand.u32 %v2139, 4294901760
    %2141 = vmatpush1.msra.mxu0 %v2140
    %2142 = vmatprep.subr.mxu0 0.0
    %v2143 = vand.u32 %v101, 4294901760
    %v2144 = vsub.f32 %v101, %v2143
    %v2145 = vand.u32 %v2144, 4294901760
    %v2146 = vsub.f32 %v2144, %v2145
    %v2147 = vand.u32 %v2146, 4294901760
    %2148 = vmatpush1.msra.mxu0 %v2147
    %2149 = vmatprep.subr.mxu0 0.0
    %v2150 = vand.u32 %v102, 4294901760
    %v2151 = vsub.f32 %v102, %v2150
    %v2152 = vand.u32 %v2151, 4294901760
    %v2153 = vsub.f32 %v2151, %v2152
    %v2154 = vand.u32 %v2153, 4294901760
    %2155 = vmatpush1.msra.mxu0 %v2154
    %2156 = vmatprep.subr.mxu0 0.0
    %v2157 = vand.u32 %v103, 4294901760
    %v2158 = vsub.f32 %v103, %v2157
    %v2159 = vand.u32 %v2158, 4294901760
    %v2160 = vsub.f32 %v2158, %v2159
    %v2161 = vand.u32 %v2160, 4294901760
    %2162 = vmatpush1.msra.mxu0 %v2161
    %2163 = vmatprep.subr.mxu0 0.0
    %v2164 = vand.u32 %v104, 4294901760
    %v2165 = vsub.f32 %v104, %v2164
    %v2166 = vand.u32 %v2165, 4294901760
    %v2167 = vsub.f32 %v2165, %v2166
    %v2168 = vand.u32 %v2167, 4294901760
    %2169 = vmatpush1.msra.mxu0 %v2168
    %2170 = vmatprep.subr.mxu0 0.0
    %v2171 = vand.u32 %v105, 4294901760
    %v2172 = vsub.f32 %v105, %v2171
    %v2173 = vand.u32 %v2172, 4294901760
    %v2174 = vsub.f32 %v2172, %v2173
    %v2175 = vand.u32 %v2174, 4294901760
    %2176 = vmatpush1.msra.mxu0 %v2175
    %2177 = vmatprep.subr.mxu0 0.0
    %v2178 = vand.u32 %v106, 4294901760
    %v2179 = vsub.f32 %v106, %v2178
    %v2180 = vand.u32 %v2179, 4294901760
    %v2181 = vsub.f32 %v2179, %v2180
    %v2182 = vand.u32 %v2181, 4294901760
    %2183 = vmatpush1.msra.mxu0 %v2182
    %2184 = vmatprep.subr.mxu0 0.0
    %v2185 = vand.u32 %v107, 4294901760
    %v2186 = vsub.f32 %v107, %v2185
    %v2187 = vand.u32 %v2186, 4294901760
    %v2188 = vsub.f32 %v2186, %v2187
    %v2189 = vand.u32 %v2188, 4294901760
    %2190 = vmatpush1.msra.mxu0 %v2189
    %2191 = vmatprep.subr.mxu0 0.0
    %v2192 = vand.u32 %v108, 4294901760
    %v2193 = vsub.f32 %v108, %v2192
    %v2194 = vand.u32 %v2193, 4294901760
    %v2195 = vsub.f32 %v2193, %v2194
    %v2196 = vand.u32 %v2195, 4294901760
    %2197 = vmatpush1.msra.mxu0 %v2196
    %2198 = vmatprep.subr.mxu0 0.0
    %v2199 = vand.u32 %v109, 4294901760
    %v2200 = vsub.f32 %v109, %v2199
    %v2201 = vand.u32 %v2200, 4294901760
    %v2202 = vsub.f32 %v2200, %v2201
    %v2203 = vand.u32 %v2202, 4294901760
    %2204 = vmatpush1.msra.mxu0 %v2203
    %2205 = vmatprep.subr.mxu0 0.0
    %v2206 = vand.u32 %v110, 4294901760
    %v2207 = vsub.f32 %v110, %v2206
    %v2208 = vand.u32 %v2207, 4294901760
    %v2209 = vsub.f32 %v2207, %v2208
    %v2210 = vand.u32 %v2209, 4294901760
    %2211 = vmatpush1.msra.mxu0 %v2210
    %2212 = vmatprep.subr.mxu0 0.0
    %v2213 = vand.u32 %v111, 4294901760
    %v2214 = vsub.f32 %v111, %v2213
    %v2215 = vand.u32 %v2214, 4294901760
    %v2216 = vsub.f32 %v2214, %v2215
    %v2217 = vand.u32 %v2216, 4294901760
    %2218 = vmatpush1.msra.mxu0 %v2217
    %2219 = vmatprep.subr.mxu0 0.0
    %v2220 = vand.u32 %v112, 4294901760
    %v2221 = vsub.f32 %v112, %v2220
    %v2222 = vand.u32 %v2221, 4294901760
    %v2223 = vsub.f32 %v2221, %v2222
    %v2224 = vand.u32 %v2223, 4294901760
    %2225 = vmatpush1.msra.mxu0 %v2224
    %v2226 = vand.u32 %v156, 4294901760
    %2227 = vmatprep.mubr.f32.mxu0 %v2226
    %v2228 = vand.u32 %v148, 4294901760
    %2229 = vmatmul.mubr.f32.gmra.mrb[0].mxu0 %v2228
    %v2230 = vpop.f32.mrb[0].mxu0
    %v2231 = vadd.f32 %v1999, %v2230
    %v2232 = vpop.f32.mrb[0].mxu0
    %2233 = vdwg.mxu0
    %2234 = vmatprep.subr.mxu0 0.0
    %v2235 = vand.u32 %v81, 4294901760
    %v2236 = vsub.f32 %v81, %v2235
    %2237 = vmatpush1.msra.mxu0 %v2236
    %2238 = vmatprep.subr.mxu0 0.0
    %v2239 = vand.u32 %v82, 4294901760
    %v2240 = vsub.f32 %v82, %v2239
    %2241 = vmatpush1.msra.mxu0 %v2240
    %2242 = vmatprep.subr.mxu0 0.0
    %v2243 = vand.u32 %v83, 4294901760
    %v2244 = vsub.f32 %v83, %v2243
    %2245 = vmatpush1.msra.mxu0 %v2244
    %2246 = vmatprep.subr.mxu0 0.0
    %v2247 = vand.u32 %v84, 4294901760
    %v2248 = vsub.f32 %v84, %v2247
    %2249 = vmatpush1.msra.mxu0 %v2248
    %2250 = vmatprep.subr.mxu0 0.0
    %v2251 = vand.u32 %v85, 4294901760
    %v2252 = vsub.f32 %v85, %v2251
    %2253 = vmatpush1.msra.mxu0 %v2252
    %2254 = vmatprep.subr.mxu0 0.0
    %v2255 = vand.u32 %v86, 4294901760
    %v2256 = vsub.f32 %v86, %v2255
    %2257 = vmatpush1.msra.mxu0 %v2256
    %2258 = vmatprep.subr.mxu0 0.0
    %v2259 = vand.u32 %v87, 4294901760
    %v2260 = vsub.f32 %v87, %v2259
    %2261 = vmatpush1.msra.mxu0 %v2260
    %2262 = vmatprep.subr.mxu0 0.0
    %v2263 = vand.u32 %v88, 4294901760
    %v2264 = vsub.f32 %v88, %v2263
    %2265 = vmatpush1.msra.mxu0 %v2264
    %2266 = vmatprep.subr.mxu0 0.0
    %v2267 = vand.u32 %v89, 4294901760
    %v2268 = vsub.f32 %v89, %v2267
    %2269 = vmatpush1.msra.mxu0 %v2268
    %2270 = vmatprep.subr.mxu0 0.0
    %v2271 = vand.u32 %v90, 4294901760
    %v2272 = vsub.f32 %v90, %v2271
    %2273 = vmatpush1.msra.mxu0 %v2272
    %2274 = vmatprep.subr.mxu0 0.0
    %v2275 = vand.u32 %v91, 4294901760
    %v2276 = vsub.f32 %v91, %v2275
    %2277 = vmatpush1.msra.mxu0 %v2276
    %2278 = vmatprep.subr.mxu0 0.0
    %v2279 = vand.u32 %v92, 4294901760
    %v2280 = vsub.f32 %v92, %v2279
    %2281 = vmatpush1.msra.mxu0 %v2280
    %2282 = vmatprep.subr.mxu0 0.0
    %v2283 = vand.u32 %v93, 4294901760
    %v2284 = vsub.f32 %v93, %v2283
    %2285 = vmatpush1.msra.mxu0 %v2284
    %2286 = vmatprep.subr.mxu0 0.0
    %v2287 = vand.u32 %v94, 4294901760
    %v2288 = vsub.f32 %v94, %v2287
    %2289 = vmatpush1.msra.mxu0 %v2288
    %2290 = vmatprep.subr.mxu0 0.0
    %v2291 = vand.u32 %v95, 4294901760
    %v2292 = vsub.f32 %v95, %v2291
    %2293 = vmatpush1.msra.mxu0 %v2292
    %2294 = vmatprep.subr.mxu0 0.0
    %v2295 = vand.u32 %v96, 4294901760
    %v2296 = vsub.f32 %v96, %v2295
    %2297 = vmatpush1.msra.mxu0 %v2296
    %2298 = vmatprep.subr.mxu0 0.0
    %v2299 = vand.u32 %v97, 4294901760
    %v2300 = vsub.f32 %v97, %v2299
    %2301 = vmatpush1.msra.mxu0 %v2300
    %2302 = vmatprep.subr.mxu0 0.0
    %v2303 = vand.u32 %v98, 4294901760
    %v2304 = vsub.f32 %v98, %v2303
    %2305 = vmatpush1.msra.mxu0 %v2304
    %2306 = vmatprep.subr.mxu0 0.0
    %v2307 = vand.u32 %v99, 4294901760
    %v2308 = vsub.f32 %v99, %v2307
    %2309 = vmatpush1.msra.mxu0 %v2308
    %2310 = vmatprep.subr.mxu0 0.0
    %v2311 = vand.u32 %v100, 4294901760
    %v2312 = vsub.f32 %v100, %v2311
    %2313 = vmatpush1.msra.mxu0 %v2312
    %2314 = vmatprep.subr.mxu0 0.0
    %v2315 = vand.u32 %v101, 4294901760
    %v2316 = vsub.f32 %v101, %v2315
    %2317 = vmatpush1.msra.mxu0 %v2316
    %2318 = vmatprep.subr.mxu0 0.0
    %v2319 = vand.u32 %v102, 4294901760
    %v2320 = vsub.f32 %v102, %v2319
    %2321 = vmatpush1.msra.mxu0 %v2320
    %2322 = vmatprep.subr.mxu0 0.0
    %v2323 = vand.u32 %v103, 4294901760
    %v2324 = vsub.f32 %v103, %v2323
    %2325 = vmatpush1.msra.mxu0 %v2324
    %2326 = vmatprep.subr.mxu0 0.0
    %v2327 = vand.u32 %v104, 4294901760
    %v2328 = vsub.f32 %v104, %v2327
    %2329 = vmatpush1.msra.mxu0 %v2328
    %2330 = vmatprep.subr.mxu0 0.0
    %v2331 = vand.u32 %v105, 4294901760
    %v2332 = vsub.f32 %v105, %v2331
    %2333 = vmatpush1.msra.mxu0 %v2332
    %2334 = vmatprep.subr.mxu0 0.0
    %v2335 = vand.u32 %v106, 4294901760
    %v2336 = vsub.f32 %v106, %v2335
    %2337 = vmatpush1.msra.mxu0 %v2336
    %2338 = vmatprep.subr.mxu0 0.0
    %v2339 = vand.u32 %v107, 4294901760
    %v2340 = vsub.f32 %v107, %v2339
    %2341 = vmatpush1.msra.mxu0 %v2340
    %2342 = vmatprep.subr.mxu0 0.0
    %v2343 = vand.u32 %v108, 4294901760
    %v2344 = vsub.f32 %v108, %v2343
    %2345 = vmatpush1.msra.mxu0 %v2344
    %2346 = vmatprep.subr.mxu0 0.0
    %v2347 = vand.u32 %v109, 4294901760
    %v2348 = vsub.f32 %v109, %v2347
    %2349 = vmatpush1.msra.mxu0 %v2348
    %2350 = vmatprep.subr.mxu0 0.0
    %v2351 = vand.u32 %v110, 4294901760
    %v2352 = vsub.f32 %v110, %v2351
    %2353 = vmatpush1.msra.mxu0 %v2352
    %2354 = vmatprep.subr.mxu0 0.0
    %v2355 = vand.u32 %v111, 4294901760
    %v2356 = vsub.f32 %v111, %v2355
    %2357 = vmatpush1.msra.mxu0 %v2356
    %2358 = vmatprep.subr.mxu0 0.0
    %v2359 = vand.u32 %v112, 4294901760
    %v2360 = vsub.f32 %v112, %v2359
    %2361 = vmatpush1.msra.mxu0 %v2360
    %v2362 = vand.u32 %v156, 4294901760
    %v2363 = vsub.f32 %v156, %v2362
    %2364 = vmatprep.mubr.f32.mxu0 %v2363
    %v2365 = vand.u32 %v148, 4294901760
    %v2366 = vsub.f32 %v148, %v2365
    %2367 = vmatmul.mubr.f32.gmra.mrb[0].mxu0 %v2366
    %v2368 = vpop.f32.mrb[0].mxu0
    %v2369 = vadd.f32 %v2231, %v2368
    %v2370 = vpop.f32.mrb[0].mxu0
    %2371 = vdwg.mxu0
    %2372 = vmatprep.subr.mxu0 0.0
    %v2373 = vand.u32 %v81, 4294901760
    %2374 = vmatpush1.msra.mxu0 %v2373
    %2375 = vmatprep.subr.mxu0 0.0
    %v2376 = vand.u32 %v82, 4294901760
    %2377 = vmatpush1.msra.mxu0 %v2376
    %2378 = vmatprep.subr.mxu0 0.0
    %v2379 = vand.u32 %v83, 4294901760
    %2380 = vmatpush1.msra.mxu0 %v2379
    %2381 = vmatprep.subr.mxu0 0.0
    %v2382 = vand.u32 %v84, 4294901760
    %2383 = vmatpush1.msra.mxu0 %v2382
    %2384 = vmatprep.subr.mxu0 0.0
    %v2385 = vand.u32 %v85, 4294901760
    %2386 = vmatpush1.msra.mxu0 %v2385
    %2387 = vmatprep.subr.mxu0 0.0
    %v2388 = vand.u32 %v86, 4294901760
    %2389 = vmatpush1.msra.mxu0 %v2388
    %2390 = vmatprep.subr.mxu0 0.0
    %v2391 = vand.u32 %v87, 4294901760
    %2392 = vmatpush1.msra.mxu0 %v2391
    %2393 = vmatprep.subr.mxu0 0.0
    %v2394 = vand.u32 %v88, 4294901760
    %2395 = vmatpush1.msra.mxu0 %v2394
    %2396 = vmatprep.subr.mxu0 0.0
    %v2397 = vand.u32 %v89, 4294901760
    %2398 = vmatpush1.msra.mxu0 %v2397
    %2399 = vmatprep.subr.mxu0 0.0
    %v2400 = vand.u32 %v90, 4294901760
    %2401 = vmatpush1.msra.mxu0 %v2400
    %2402 = vmatprep.subr.mxu0 0.0
    %v2403 = vand.u32 %v91, 4294901760
    %2404 = vmatpush1.msra.mxu0 %v2403
    %2405 = vmatprep.subr.mxu0 0.0
    %v2406 = vand.u32 %v92, 4294901760
    %2407 = vmatpush1.msra.mxu0 %v2406
    %2408 = vmatprep.subr.mxu0 0.0
    %v2409 = vand.u32 %v93, 4294901760
    %2410 = vmatpush1.msra.mxu0 %v2409
    %2411 = vmatprep.subr.mxu0 0.0
    %v2412 = vand.u32 %v94, 4294901760
    %2413 = vmatpush1.msra.mxu0 %v2412
    %2414 = vmatprep.subr.mxu0 0.0
    %v2415 = vand.u32 %v95, 4294901760
    %2416 = vmatpush1.msra.mxu0 %v2415
    %2417 = vmatprep.subr.mxu0 0.0
    %v2418 = vand.u32 %v96, 4294901760
    %2419 = vmatpush1.msra.mxu0 %v2418
    %2420 = vmatprep.subr.mxu0 0.0
    %v2421 = vand.u32 %v97, 4294901760
    %2422 = vmatpush1.msra.mxu0 %v2421
    %2423 = vmatprep.subr.mxu0 0.0
    %v2424 = vand.u32 %v98, 4294901760
    %2425 = vmatpush1.msra.mxu0 %v2424
    %2426 = vmatprep.subr.mxu0 0.0
    %v2427 = vand.u32 %v99, 4294901760
    %2428 = vmatpush1.msra.mxu0 %v2427
    %2429 = vmatprep.subr.mxu0 0.0
    %v2430 = vand.u32 %v100, 4294901760
    %2431 = vmatpush1.msra.mxu0 %v2430
    %2432 = vmatprep.subr.mxu0 0.0
    %v2433 = vand.u32 %v101, 4294901760
    %2434 = vmatpush1.msra.mxu0 %v2433
    %2435 = vmatprep.subr.mxu0 0.0
    %v2436 = vand.u32 %v102, 4294901760
    %2437 = vmatpush1.msra.mxu0 %v2436
    %2438 = vmatprep.subr.mxu0 0.0
    %v2439 = vand.u32 %v103, 4294901760
    %2440 = vmatpush1.msra.mxu0 %v2439
    %2441 = vmatprep.subr.mxu0 0.0
    %v2442 = vand.u32 %v104, 4294901760
    %2443 = vmatpush1.msra.mxu0 %v2442
    %2444 = vmatprep.subr.mxu0 0.0
    %v2445 = vand.u32 %v105, 4294901760
    %2446 = vmatpush1.msra.mxu0 %v2445
    %2447 = vmatprep.subr.mxu0 0.0
    %v2448 = vand.u32 %v106, 4294901760
    %2449 = vmatpush1.msra.mxu0 %v2448
    %2450 = vmatprep.subr.mxu0 0.0
    %v2451 = vand.u32 %v107, 4294901760
    %2452 = vmatpush1.msra.mxu0 %v2451
    %2453 = vmatprep.subr.mxu0 0.0
    %v2454 = vand.u32 %v108, 4294901760
    %2455 = vmatpush1.msra.mxu0 %v2454
    %2456 = vmatprep.subr.mxu0 0.0
    %v2457 = vand.u32 %v109, 4294901760
    %2458 = vmatpush1.msra.mxu0 %v2457
    %2459 = vmatprep.subr.mxu0 0.0
    %v2460 = vand.u32 %v110, 4294901760
    %2461 = vmatpush1.msra.mxu0 %v2460
    %2462 = vmatprep.subr.mxu0 0.0
    %v2463 = vand.u32 %v111, 4294901760
    %2464 = vmatpush1.msra.mxu0 %v2463
    %2465 = vmatprep.subr.mxu0 0.0
    %v2466 = vand.u32 %v112, 4294901760
    %2467 = vmatpush1.msra.mxu0 %v2466
    %v2468 = vand.u32 %v156, 4294901760
    %v2469 = vsub.f32 %v156, %v2468
    %v2470 = vand.u32 %v2469, 4294901760
    %2471 = vmatprep.mubr.f32.mxu0 %v2470
    %v2472 = vand.u32 %v148, 4294901760
    %v2473 = vsub.f32 %v148, %v2472
    %v2474 = vand.u32 %v2473, 4294901760
    %2475 = vmatmul.mubr.f32.gmra.mrb[0].mxu0 %v2474
    %v2476 = vpop.f32.mrb[0].mxu0
    %v2477 = vadd.f32 %v2369, %v2476
    %v2478 = vpop.f32.mrb[0].mxu0
    %2479 = vdwg.mxu0
    %2480 = vmatprep.subr.mxu0 0.0
    %v2481 = vand.u32 %v81, 4294901760
    %v2482 = vsub.f32 %v81, %v2481
    %v2483 = vand.u32 %v2482, 4294901760
    %2484 = vmatpush1.msra.mxu0 %v2483
    %2485 = vmatprep.subr.mxu0 0.0
    %v2486 = vand.u32 %v82, 4294901760
    %v2487 = vsub.f32 %v82, %v2486
    %v2488 = vand.u32 %v2487, 4294901760
    %2489 = vmatpush1.msra.mxu0 %v2488
    %2490 = vmatprep.subr.mxu0 0.0
    %v2491 = vand.u32 %v83, 4294901760
    %v2492 = vsub.f32 %v83, %v2491
    %v2493 = vand.u32 %v2492, 4294901760
    %2494 = vmatpush1.msra.mxu0 %v2493
    %2495 = vmatprep.subr.mxu0 0.0
    %v2496 = vand.u32 %v84, 4294901760
    %v2497 = vsub.f32 %v84, %v2496
    %v2498 = vand.u32 %v2497, 4294901760
    %2499 = vmatpush1.msra.mxu0 %v2498
    %2500 = vmatprep.subr.mxu0 0.0
    %v2501 = vand.u32 %v85, 4294901760
    %v2502 = vsub.f32 %v85, %v2501
    %v2503 = vand.u32 %v2502, 4294901760
    %2504 = vmatpush1.msra.mxu0 %v2503
    %2505 = vmatprep.subr.mxu0 0.0
    %v2506 = vand.u32 %v86, 4294901760
    %v2507 = vsub.f32 %v86, %v2506
    %v2508 = vand.u32 %v2507, 4294901760
    %2509 = vmatpush1.msra.mxu0 %v2508
    %2510 = vmatprep.subr.mxu0 0.0
    %v2511 = vand.u32 %v87, 4294901760
    %v2512 = vsub.f32 %v87, %v2511
    %v2513 = vand.u32 %v2512, 4294901760
    %2514 = vmatpush1.msra.mxu0 %v2513
    %2515 = vmatprep.subr.mxu0 0.0
    %v2516 = vand.u32 %v88, 4294901760
    %v2517 = vsub.f32 %v88, %v2516
    %v2518 = vand.u32 %v2517, 4294901760
    %2519 = vmatpush1.msra.mxu0 %v2518
    %2520 = vmatprep.subr.mxu0 0.0
    %v2521 = vand.u32 %v89, 4294901760
    %v2522 = vsub.f32 %v89, %v2521
    %v2523 = vand.u32 %v2522, 4294901760
    %2524 = vmatpush1.msra.mxu0 %v2523
    %2525 = vmatprep.subr.mxu0 0.0
    %v2526 = vand.u32 %v90, 4294901760
    %v2527 = vsub.f32 %v90, %v2526
    %v2528 = vand.u32 %v2527, 4294901760
    %2529 = vmatpush1.msra.mxu0 %v2528
    %2530 = vmatprep.subr.mxu0 0.0
    %v2531 = vand.u32 %v91, 4294901760
    %v2532 = vsub.f32 %v91, %v2531
    %v2533 = vand.u32 %v2532, 4294901760
    %2534 = vmatpush1.msra.mxu0 %v2533
    %2535 = vmatprep.subr.mxu0 0.0
    %v2536 = vand.u32 %v92, 4294901760
    %v2537 = vsub.f32 %v92, %v2536
    %v2538 = vand.u32 %v2537, 4294901760
    %2539 = vmatpush1.msra.mxu0 %v2538
    %2540 = vmatprep.subr.mxu0 0.0
    %v2541 = vand.u32 %v93, 4294901760
    %v2542 = vsub.f32 %v93, %v2541
    %v2543 = vand.u32 %v2542, 4294901760
    %2544 = vmatpush1.msra.mxu0 %v2543
    %2545 = vmatprep.subr.mxu0 0.0
    %v2546 = vand.u32 %v94, 4294901760
    %v2547 = vsub.f32 %v94, %v2546
    %v2548 = vand.u32 %v2547, 4294901760
    %2549 = vmatpush1.msra.mxu0 %v2548
    %2550 = vmatprep.subr.mxu0 0.0
    %v2551 = vand.u32 %v95, 4294901760
    %v2552 = vsub.f32 %v95, %v2551
    %v2553 = vand.u32 %v2552, 4294901760
    %2554 = vmatpush1.msra.mxu0 %v2553
    %2555 = vmatprep.subr.mxu0 0.0
    %v2556 = vand.u32 %v96, 4294901760
    %v2557 = vsub.f32 %v96, %v2556
    %v2558 = vand.u32 %v2557, 4294901760
    %2559 = vmatpush1.msra.mxu0 %v2558
    %2560 = vmatprep.subr.mxu0 0.0
    %v2561 = vand.u32 %v97, 4294901760
    %v2562 = vsub.f32 %v97, %v2561
    %v2563 = vand.u32 %v2562, 4294901760
    %2564 = vmatpush1.msra.mxu0 %v2563
    %2565 = vmatprep.subr.mxu0 0.0
    %v2566 = vand.u32 %v98, 4294901760
    %v2567 = vsub.f32 %v98, %v2566
    %v2568 = vand.u32 %v2567, 4294901760
    %2569 = vmatpush1.msra.mxu0 %v2568
    %2570 = vmatprep.subr.mxu0 0.0
    %v2571 = vand.u32 %v99, 4294901760
    %v2572 = vsub.f32 %v99, %v2571
    %v2573 = vand.u32 %v2572, 4294901760
    %2574 = vmatpush1.msra.mxu0 %v2573
    %2575 = vmatprep.subr.mxu0 0.0
    %v2576 = vand.u32 %v100, 4294901760
    %v2577 = vsub.f32 %v100, %v2576
    %v2578 = vand.u32 %v2577, 4294901760
    %2579 = vmatpush1.msra.mxu0 %v2578
    %2580 = vmatprep.subr.mxu0 0.0
    %v2581 = vand.u32 %v101, 4294901760
    %v2582 = vsub.f32 %v101, %v2581
    %v2583 = vand.u32 %v2582, 4294901760
    %2584 = vmatpush1.msra.mxu0 %v2583
    %2585 = vmatprep.subr.mxu0 0.0
    %v2586 = vand.u32 %v102, 4294901760
    %v2587 = vsub.f32 %v102, %v2586
    %v2588 = vand.u32 %v2587, 4294901760
    %2589 = vmatpush1.msra.mxu0 %v2588
    %2590 = vmatprep.subr.mxu0 0.0
    %v2591 = vand.u32 %v103, 4294901760
    %v2592 = vsub.f32 %v103, %v2591
    %v2593 = vand.u32 %v2592, 4294901760
    %2594 = vmatpush1.msra.mxu0 %v2593
    %2595 = vmatprep.subr.mxu0 0.0
    %v2596 = vand.u32 %v104, 4294901760
    %v2597 = vsub.f32 %v104, %v2596
    %v2598 = vand.u32 %v2597, 4294901760
    %2599 = vmatpush1.msra.mxu0 %v2598
    %2600 = vmatprep.subr.mxu0 0.0
    %v2601 = vand.u32 %v105, 4294901760
    %v2602 = vsub.f32 %v105, %v2601
    %v2603 = vand.u32 %v2602, 4294901760
    %2604 = vmatpush1.msra.mxu0 %v2603
    %2605 = vmatprep.subr.mxu0 0.0
    %v2606 = vand.u32 %v106, 4294901760
    %v2607 = vsub.f32 %v106, %v2606
    %v2608 = vand.u32 %v2607, 4294901760
    %2609 = vmatpush1.msra.mxu0 %v2608
    %2610 = vmatprep.subr.mxu0 0.0
    %v2611 = vand.u32 %v107, 4294901760
    %v2612 = vsub.f32 %v107, %v2611
    %v2613 = vand.u32 %v2612, 4294901760
    %2614 = vmatpush1.msra.mxu0 %v2613
    %2615 = vmatprep.subr.mxu0 0.0
    %v2616 = vand.u32 %v108, 4294901760
    %v2617 = vsub.f32 %v108, %v2616
    %v2618 = vand.u32 %v2617, 4294901760
    %2619 = vmatpush1.msra.mxu0 %v2618
    %2620 = vmatprep.subr.mxu0 0.0
    %v2621 = vand.u32 %v109, 4294901760
    %v2622 = vsub.f32 %v109, %v2621
    %v2623 = vand.u32 %v2622, 4294901760
    %2624 = vmatpush1.msra.mxu0 %v2623
    %2625 = vmatprep.subr.mxu0 0.0
    %v2626 = vand.u32 %v110, 4294901760
    %v2627 = vsub.f32 %v110, %v2626
    %v2628 = vand.u32 %v2627, 4294901760
    %2629 = vmatpush1.msra.mxu0 %v2628
    %2630 = vmatprep.subr.mxu0 0.0
    %v2631 = vand.u32 %v111, 4294901760
    %v2632 = vsub.f32 %v111, %v2631
    %v2633 = vand.u32 %v2632, 4294901760
    %2634 = vmatpush1.msra.mxu0 %v2633
    %2635 = vmatprep.subr.mxu0 0.0
    %v2636 = vand.u32 %v112, 4294901760
    %v2637 = vsub.f32 %v112, %v2636
    %v2638 = vand.u32 %v2637, 4294901760
    %2639 = vmatpush1.msra.mxu0 %v2638
    %v2640 = vand.u32 %v156, 4294901760
    %2641 = vmatprep.mubr.f32.mxu0 %v2640
    %v2642 = vand.u32 %v148, 4294901760
    %2643 = vmatmul.mubr.f32.gmra.mrb[0].mxu0 %v2642
    %v2644 = vpop.f32.mrb[0].mxu0
    %v2645 = vadd.f32 %v2477, %v2644
    %v2646 = vpop.f32.mrb[0].mxu0
    %2647 = vdwg.mxu0
    %2648 = vmatprep.subr.mxu0 0.0
    %v2649 = vand.u32 %v81, 4294901760
    %2650 = vmatpush1.msra.mxu0 %v2649
    %2651 = vmatprep.subr.mxu0 0.0
    %v2652 = vand.u32 %v82, 4294901760
    %2653 = vmatpush1.msra.mxu0 %v2652
    %2654 = vmatprep.subr.mxu0 0.0
    %v2655 = vand.u32 %v83, 4294901760
    %2656 = vmatpush1.msra.mxu0 %v2655
    %2657 = vmatprep.subr.mxu0 0.0
    %v2658 = vand.u32 %v84, 4294901760
    %2659 = vmatpush1.msra.mxu0 %v2658
    %2660 = vmatprep.subr.mxu0 0.0
    %v2661 = vand.u32 %v85, 4294901760
    %2662 = vmatpush1.msra.mxu0 %v2661
    %2663 = vmatprep.subr.mxu0 0.0
    %v2664 = vand.u32 %v86, 4294901760
    %2665 = vmatpush1.msra.mxu0 %v2664
    %2666 = vmatprep.subr.mxu0 0.0
    %v2667 = vand.u32 %v87, 4294901760
    %2668 = vmatpush1.msra.mxu0 %v2667
    %2669 = vmatprep.subr.mxu0 0.0
    %v2670 = vand.u32 %v88, 4294901760
    %2671 = vmatpush1.msra.mxu0 %v2670
    %2672 = vmatprep.subr.mxu0 0.0
    %v2673 = vand.u32 %v89, 4294901760
    %2674 = vmatpush1.msra.mxu0 %v2673
    %2675 = vmatprep.subr.mxu0 0.0
    %v2676 = vand.u32 %v90, 4294901760
    %2677 = vmatpush1.msra.mxu0 %v2676
    %2678 = vmatprep.subr.mxu0 0.0
    %v2679 = vand.u32 %v91, 4294901760
    %2680 = vmatpush1.msra.mxu0 %v2679
    %2681 = vmatprep.subr.mxu0 0.0
    %v2682 = vand.u32 %v92, 4294901760
    %2683 = vmatpush1.msra.mxu0 %v2682
    %2684 = vmatprep.subr.mxu0 0.0
    %v2685 = vand.u32 %v93, 4294901760
    %2686 = vmatpush1.msra.mxu0 %v2685
    %2687 = vmatprep.subr.mxu0 0.0
    %v2688 = vand.u32 %v94, 4294901760
    %2689 = vmatpush1.msra.mxu0 %v2688
    %2690 = vmatprep.subr.mxu0 0.0
    %v2691 = vand.u32 %v95, 4294901760
    %2692 = vmatpush1.msra.mxu0 %v2691
    %2693 = vmatprep.subr.mxu0 0.0
    %v2694 = vand.u32 %v96, 4294901760
    %2695 = vmatpush1.msra.mxu0 %v2694
    %2696 = vmatprep.subr.mxu0 0.0
    %v2697 = vand.u32 %v97, 4294901760
    %2698 = vmatpush1.msra.mxu0 %v2697
    %2699 = vmatprep.subr.mxu0 0.0
    %v2700 = vand.u32 %v98, 4294901760
    %2701 = vmatpush1.msra.mxu0 %v2700
    %2702 = vmatprep.subr.mxu0 0.0
    %v2703 = vand.u32 %v99, 4294901760
    %2704 = vmatpush1.msra.mxu0 %v2703
    %2705 = vmatprep.subr.mxu0 0.0
    %v2706 = vand.u32 %v100, 4294901760
    %2707 = vmatpush1.msra.mxu0 %v2706
    %2708 = vmatprep.subr.mxu0 0.0
    %v2709 = vand.u32 %v101, 4294901760
    %2710 = vmatpush1.msra.mxu0 %v2709
    %2711 = vmatprep.subr.mxu0 0.0
    %v2712 = vand.u32 %v102, 4294901760
    %2713 = vmatpush1.msra.mxu0 %v2712
    %2714 = vmatprep.subr.mxu0 0.0
    %v2715 = vand.u32 %v103, 4294901760
    %2716 = vmatpush1.msra.mxu0 %v2715
    %2717 = vmatprep.subr.mxu0 0.0
    %v2718 = vand.u32 %v104, 4294901760
    %2719 = vmatpush1.msra.mxu0 %v2718
    %2720 = vmatprep.subr.mxu0 0.0
    %v2721 = vand.u32 %v105, 4294901760
    %2722 = vmatpush1.msra.mxu0 %v2721
    %2723 = vmatprep.subr.mxu0 0.0
    %v2724 = vand.u32 %v106, 4294901760
    %2725 = vmatpush1.msra.mxu0 %v2724
    %2726 = vmatprep.subr.mxu0 0.0
    %v2727 = vand.u32 %v107, 4294901760
    %2728 = vmatpush1.msra.mxu0 %v2727
    %2729 = vmatprep.subr.mxu0 0.0
    %v2730 = vand.u32 %v108, 4294901760
    %2731 = vmatpush1.msra.mxu0 %v2730
    %2732 = vmatprep.subr.mxu0 0.0
    %v2733 = vand.u32 %v109, 4294901760
    %2734 = vmatpush1.msra.mxu0 %v2733
    %2735 = vmatprep.subr.mxu0 0.0
    %v2736 = vand.u32 %v110, 4294901760
    %2737 = vmatpush1.msra.mxu0 %v2736
    %2738 = vmatprep.subr.mxu0 0.0
    %v2739 = vand.u32 %v111, 4294901760
    %2740 = vmatpush1.msra.mxu0 %v2739
    %2741 = vmatprep.subr.mxu0 0.0
    %v2742 = vand.u32 %v112, 4294901760
    %2743 = vmatpush1.msra.mxu0 %v2742
    %v2744 = vand.u32 %v156, 4294901760
    %2745 = vmatprep.mubr.f32.mxu0 %v2744
    %v2746 = vand.u32 %v148, 4294901760
    %2747 = vmatmul.mubr.f32.gmra.mrb[0].mxu0 %v2746
    %v2748 = vpop.f32.mrb[0].mxu0
    %v2749 = vadd.f32 %v2645, %v2748
    %v2750 = vpop.f32.mrb[0].mxu0
    %2751 = vdwg.mxu0
    %2752 = vmatprep.subr.mxu0 0.0
    %v2753 = vand.u32 %v113, 4294901760
    %2754 = vmatpush1.msra.mxu0 %v2753
    %2755 = vmatprep.subr.mxu0 0.0
    %v2756 = vand.u32 %v114, 4294901760
    %2757 = vmatpush1.msra.mxu0 %v2756
    %2758 = vmatprep.subr.mxu0 0.0
    %2759 = vmatpush1.msra.mxu0 0.0
    %2760 = vmatprep.subr.mxu0 0.0
    %2761 = vmatpush1.msra.mxu0 0.0
    %2762 = vmatprep.subr.mxu0 0.0
    %2763 = vmatpush1.msra.mxu0 0.0
    %2764 = vmatprep.subr.mxu0 0.0
    %2765 = vmatpush1.msra.mxu0 0.0
    %2766 = vmatprep.subr.mxu0 0.0
    %2767 = vmatpush1.msra.mxu0 0.0
    %2768 = vmatprep.subr.mxu0 0.0
    %2769 = vmatpush1.msra.mxu0 0.0
    %2770 = vmatprep.subr.mxu0 0.0
    %2771 = vmatpush1.msra.mxu0 0.0
    %2772 = vmatprep.subr.mxu0 0.0
    %2773 = vmatpush1.msra.mxu0 0.0
    %2774 = vmatprep.subr.mxu0 0.0
    %2775 = vmatpush1.msra.mxu0 0.0
    %2776 = vmatprep.subr.mxu0 0.0
    %2777 = vmatpush1.msra.mxu0 0.0
    %2778 = vmatprep.subr.mxu0 0.0
    %2779 = vmatpush1.msra.mxu0 0.0
    %2780 = vmatprep.subr.mxu0 0.0
    %2781 = vmatpush1.msra.mxu0 0.0
    %2782 = vmatprep.subr.mxu0 0.0
    %2783 = vmatpush1.msra.mxu0 0.0
    %2784 = vmatprep.subr.mxu0 0.0
    %2785 = vmatpush1.msra.mxu0 0.0
    %2786 = vmatprep.subr.mxu0 0.0
    %2787 = vmatpush1.msra.mxu0 0.0
    %2788 = vmatprep.subr.mxu0 0.0
    %2789 = vmatpush1.msra.mxu0 0.0
    %2790 = vmatprep.subr.mxu0 0.0
    %2791 = vmatpush1.msra.mxu0 0.0
    %2792 = vmatprep.subr.mxu0 0.0
    %2793 = vmatpush1.msra.mxu0 0.0
    %2794 = vmatprep.subr.mxu0 0.0
    %2795 = vmatpush1.msra.mxu0 0.0
    %2796 = vmatprep.subr.mxu0 0.0
    %2797 = vmatpush1.msra.mxu0 0.0
    %2798 = vmatprep.subr.mxu0 0.0
    %2799 = vmatpush1.msra.mxu0 0.0
    %2800 = vmatprep.subr.mxu0 0.0
    %2801 = vmatpush1.msra.mxu0 0.0
    %2802 = vmatprep.subr.mxu0 0.0
    %2803 = vmatpush1.msra.mxu0 0.0
    %2804 = vmatprep.subr.mxu0 0.0
    %2805 = vmatpush1.msra.mxu0 0.0
    %2806 = vmatprep.subr.mxu0 0.0
    %2807 = vmatpush1.msra.mxu0 0.0
    %2808 = vmatprep.subr.mxu0 0.0
    %2809 = vmatpush1.msra.mxu0 0.0
    %2810 = vmatprep.subr.mxu0 0.0
    %2811 = vmatpush1.msra.mxu0 0.0
    %2812 = vmatprep.subr.mxu0 0.0
    %2813 = vmatpush1.msra.mxu0 0.0
    %2814 = vmatprep.subr.mxu0 0.0
    %2815 = vmatpush1.msra.mxu0 0.0
    %2816 = vmatprep.subr.mxu0 0.0
    %2817 = vmatpush1.msra.mxu0 0.0
    %2818 = vmatprep.mubr.f32.mxu0 0.0
    %v2819 = vand.u32 %v164, 4294901760
    %v2820 = vsub.f32 %v164, %v2819
    %v2821 = vand.u32 %v2820, 4294901760
    %v2822 = vsub.f32 %v2820, %v2821
    %v2823 = vand.u32 %v2822, 4294901760
    %2824 = vmatmul.mubr.f32.gmra.mrb[0].mxu0 %v2823
    %v2825 = vpop.f32.mrb[0].mxu0
    %v2826 = vadd.f32 %v2749, %v2825
    %v2827 = vpop.f32.mrb[0].mxu0
    %2828 = vdwg.mxu0
    %2829 = vmatprep.subr.mxu0 0.0
    %v2830 = vand.u32 %v113, 4294901760
    %v2831 = vsub.f32 %v113, %v2830
    %v2832 = vand.u32 %v2831, 4294901760
    %v2833 = vsub.f32 %v2831, %v2832
    %v2834 = vand.u32 %v2833, 4294901760
    %2835 = vmatpush1.msra.mxu0 %v2834
    %2836 = vmatprep.subr.mxu0 0.0
    %v2837 = vand.u32 %v114, 4294901760
    %v2838 = vsub.f32 %v114, %v2837
    %v2839 = vand.u32 %v2838, 4294901760
    %v2840 = vsub.f32 %v2838, %v2839
    %v2841 = vand.u32 %v2840, 4294901760
    %2842 = vmatpush1.msra.mxu0 %v2841
    %2843 = vmatprep.subr.mxu0 0.0
    %2844 = vmatpush1.msra.mxu0 0.0
    %2845 = vmatprep.subr.mxu0 0.0
    %2846 = vmatpush1.msra.mxu0 0.0
    %2847 = vmatprep.subr.mxu0 0.0
    %2848 = vmatpush1.msra.mxu0 0.0
    %2849 = vmatprep.subr.mxu0 0.0
    %2850 = vmatpush1.msra.mxu0 0.0
    %2851 = vmatprep.subr.mxu0 0.0
    %2852 = vmatpush1.msra.mxu0 0.0
    %2853 = vmatprep.subr.mxu0 0.0
    %2854 = vmatpush1.msra.mxu0 0.0
    %2855 = vmatprep.subr.mxu0 0.0
    %2856 = vmatpush1.msra.mxu0 0.0
    %2857 = vmatprep.subr.mxu0 0.0
    %2858 = vmatpush1.msra.mxu0 0.0
    %2859 = vmatprep.subr.mxu0 0.0
    %2860 = vmatpush1.msra.mxu0 0.0
    %2861 = vmatprep.subr.mxu0 0.0
    %2862 = vmatpush1.msra.mxu0 0.0
    %2863 = vmatprep.subr.mxu0 0.0
    %2864 = vmatpush1.msra.mxu0 0.0
    %2865 = vmatprep.subr.mxu0 0.0
    %2866 = vmatpush1.msra.mxu0 0.0
    %2867 = vmatprep.subr.mxu0 0.0
    %2868 = vmatpush1.msra.mxu0 0.0
    %2869 = vmatprep.subr.mxu0 0.0
    %2870 = vmatpush1.msra.mxu0 0.0
    %2871 = vmatprep.subr.mxu0 0.0
    %2872 = vmatpush1.msra.mxu0 0.0
    %2873 = vmatprep.subr.mxu0 0.0
    %2874 = vmatpush1.msra.mxu0 0.0
    %2875 = vmatprep.subr.mxu0 0.0
    %2876 = vmatpush1.msra.mxu0 0.0
    %2877 = vmatprep.subr.mxu0 0.0
    %2878 = vmatpush1.msra.mxu0 0.0
    %2879 = vmatprep.subr.mxu0 0.0
    %2880 = vmatpush1.msra.mxu0 0.0
    %2881 = vmatprep.subr.mxu0 0.0
    %2882 = vmatpush1.msra.mxu0 0.0
    %2883 = vmatprep.subr.mxu0 0.0
    %2884 = vmatpush1.msra.mxu0 0.0
    %2885 = vmatprep.subr.mxu0 0.0
    %2886 = vmatpush1.msra.mxu0 0.0
    %2887 = vmatprep.subr.mxu0 0.0
    %2888 = vmatpush1.msra.mxu0 0.0
    %2889 = vmatprep.subr.mxu0 0.0
    %2890 = vmatpush1.msra.mxu0 0.0
    %2891 = vmatprep.subr.mxu0 0.0
    %2892 = vmatpush1.msra.mxu0 0.0
    %2893 = vmatprep.subr.mxu0 0.0
    %2894 = vmatpush1.msra.mxu0 0.0
    %2895 = vmatprep.subr.mxu0 0.0
    %2896 = vmatpush1.msra.mxu0 0.0
    %2897 = vmatprep.subr.mxu0 0.0
    %2898 = vmatpush1.msra.mxu0 0.0
    %2899 = vmatprep.subr.mxu0 0.0
    %2900 = vmatpush1.msra.mxu0 0.0
    %2901 = vmatprep.subr.mxu0 0.0
    %2902 = vmatpush1.msra.mxu0 0.0
    %2903 = vmatprep.mubr.f32.mxu0 0.0
    %v2904 = vand.u32 %v164, 4294901760
    %2905 = vmatmul.mubr.f32.gmra.mrb[0].mxu0 %v2904
    %v2906 = vpop.f32.mrb[0].mxu0
    %v2907 = vadd.f32 %v2826, %v2906
    %v2908 = vpop.f32.mrb[0].mxu0
    %2909 = vdwg.mxu0
    %2910 = vmatprep.subr.mxu0 0.0
    %v2911 = vand.u32 %v113, 4294901760
    %v2912 = vsub.f32 %v113, %v2911
    %2913 = vmatpush1.msra.mxu0 %v2912
    %2914 = vmatprep.subr.mxu0 0.0
    %v2915 = vand.u32 %v114, 4294901760
    %v2916 = vsub.f32 %v114, %v2915
    %2917 = vmatpush1.msra.mxu0 %v2916
    %2918 = vmatprep.subr.mxu0 0.0
    %2919 = vmatpush1.msra.mxu0 0.0
    %2920 = vmatprep.subr.mxu0 0.0
    %2921 = vmatpush1.msra.mxu0 0.0
    %2922 = vmatprep.subr.mxu0 0.0
    %2923 = vmatpush1.msra.mxu0 0.0
    %2924 = vmatprep.subr.mxu0 0.0
    %2925 = vmatpush1.msra.mxu0 0.0
    %2926 = vmatprep.subr.mxu0 0.0
    %2927 = vmatpush1.msra.mxu0 0.0
    %2928 = vmatprep.subr.mxu0 0.0
    %2929 = vmatpush1.msra.mxu0 0.0
    %2930 = vmatprep.subr.mxu0 0.0
    %2931 = vmatpush1.msra.mxu0 0.0
    %2932 = vmatprep.subr.mxu0 0.0
    %2933 = vmatpush1.msra.mxu0 0.0
    %2934 = vmatprep.subr.mxu0 0.0
    %2935 = vmatpush1.msra.mxu0 0.0
    %2936 = vmatprep.subr.mxu0 0.0
    %2937 = vmatpush1.msra.mxu0 0.0
    %2938 = vmatprep.subr.mxu0 0.0
    %2939 = vmatpush1.msra.mxu0 0.0
    %2940 = vmatprep.subr.mxu0 0.0
    %2941 = vmatpush1.msra.mxu0 0.0
    %2942 = vmatprep.subr.mxu0 0.0
    %2943 = vmatpush1.msra.mxu0 0.0
    %2944 = vmatprep.subr.mxu0 0.0
    %2945 = vmatpush1.msra.mxu0 0.0
    %2946 = vmatprep.subr.mxu0 0.0
    %2947 = vmatpush1.msra.mxu0 0.0
    %2948 = vmatprep.subr.mxu0 0.0
    %2949 = vmatpush1.msra.mxu0 0.0
    %2950 = vmatprep.subr.mxu0 0.0
    %2951 = vmatpush1.msra.mxu0 0.0
    %2952 = vmatprep.subr.mxu0 0.0
    %2953 = vmatpush1.msra.mxu0 0.0
    %2954 = vmatprep.subr.mxu0 0.0
    %2955 = vmatpush1.msra.mxu0 0.0
    %2956 = vmatprep.subr.mxu0 0.0
    %2957 = vmatpush1.msra.mxu0 0.0
    %2958 = vmatprep.subr.mxu0 0.0
    %2959 = vmatpush1.msra.mxu0 0.0
    %2960 = vmatprep.subr.mxu0 0.0
    %2961 = vmatpush1.msra.mxu0 0.0
    %2962 = vmatprep.subr.mxu0 0.0
    %2963 = vmatpush1.msra.mxu0 0.0
    %2964 = vmatprep.subr.mxu0 0.0
    %2965 = vmatpush1.msra.mxu0 0.0
    %2966 = vmatprep.subr.mxu0 0.0
    %2967 = vmatpush1.msra.mxu0 0.0
    %2968 = vmatprep.subr.mxu0 0.0
    %2969 = vmatpush1.msra.mxu0 0.0
    %2970 = vmatprep.subr.mxu0 0.0
    %2971 = vmatpush1.msra.mxu0 0.0
    %2972 = vmatprep.subr.mxu0 0.0
    %2973 = vmatpush1.msra.mxu0 0.0
    %2974 = vmatprep.subr.mxu0 0.0
    %2975 = vmatpush1.msra.mxu0 0.0
    %2976 = vmatprep.subr.mxu0 0.0
    %2977 = vmatpush1.msra.mxu0 0.0
    %2978 = vmatprep.mubr.f32.mxu0 0.0
    %v2979 = vand.u32 %v164, 4294901760
    %v2980 = vsub.f32 %v164, %v2979
    %2981 = vmatmul.mubr.f32.gmra.mrb[0].mxu0 %v2980
    %v2982 = vpop.f32.mrb[0].mxu0
    %v2983 = vadd.f32 %v2907, %v2982
    %v2984 = vpop.f32.mrb[0].mxu0
    %2985 = vdwg.mxu0
    %2986 = vmatprep.subr.mxu0 0.0
    %v2987 = vand.u32 %v113, 4294901760
    %2988 = vmatpush1.msra.mxu0 %v2987
    %2989 = vmatprep.subr.mxu0 0.0
    %v2990 = vand.u32 %v114, 4294901760
    %2991 = vmatpush1.msra.mxu0 %v2990
    %2992 = vmatprep.subr.mxu0 0.0
    %2993 = vmatpush1.msra.mxu0 0.0
    %2994 = vmatprep.subr.mxu0 0.0
    %2995 = vmatpush1.msra.mxu0 0.0
    %2996 = vmatprep.subr.mxu0 0.0
    %2997 = vmatpush1.msra.mxu0 0.0
    %2998 = vmatprep.subr.mxu0 0.0
    %2999 = vmatpush1.msra.mxu0 0.0
    %3000 = vmatprep.subr.mxu0 0.0
    %3001 = vmatpush1.msra.mxu0 0.0
    %3002 = vmatprep.subr.mxu0 0.0
    %3003 = vmatpush1.msra.mxu0 0.0
    %3004 = vmatprep.subr.mxu0 0.0
    %3005 = vmatpush1.msra.mxu0 0.0
    %3006 = vmatprep.subr.mxu0 0.0
    %3007 = vmatpush1.msra.mxu0 0.0
    %3008 = vmatprep.subr.mxu0 0.0
    %3009 = vmatpush1.msra.mxu0 0.0
    %3010 = vmatprep.subr.mxu0 0.0
    %3011 = vmatpush1.msra.mxu0 0.0
    %3012 = vmatprep.subr.mxu0 0.0
    %3013 = vmatpush1.msra.mxu0 0.0
    %3014 = vmatprep.subr.mxu0 0.0
    %3015 = vmatpush1.msra.mxu0 0.0
    %3016 = vmatprep.subr.mxu0 0.0
    %3017 = vmatpush1.msra.mxu0 0.0
    %3018 = vmatprep.subr.mxu0 0.0
    %3019 = vmatpush1.msra.mxu0 0.0
    %3020 = vmatprep.subr.mxu0 0.0
    %3021 = vmatpush1.msra.mxu0 0.0
    %3022 = vmatprep.subr.mxu0 0.0
    %3023 = vmatpush1.msra.mxu0 0.0
    %3024 = vmatprep.subr.mxu0 0.0
    %3025 = vmatpush1.msra.mxu0 0.0
    %3026 = vmatprep.subr.mxu0 0.0
    %3027 = vmatpush1.msra.mxu0 0.0
    %3028 = vmatprep.subr.mxu0 0.0
    %3029 = vmatpush1.msra.mxu0 0.0
    %3030 = vmatprep.subr.mxu0 0.0
    %3031 = vmatpush1.msra.mxu0 0.0
    %3032 = vmatprep.subr.mxu0 0.0
    %3033 = vmatpush1.msra.mxu0 0.0
    %3034 = vmatprep.subr.mxu0 0.0
    %3035 = vmatpush1.msra.mxu0 0.0
    %3036 = vmatprep.subr.mxu0 0.0
    %3037 = vmatpush1.msra.mxu0 0.0
    %3038 = vmatprep.subr.mxu0 0.0
    %3039 = vmatpush1.msra.mxu0 0.0
    %3040 = vmatprep.subr.mxu0 0.0
    %3041 = vmatpush1.msra.mxu0 0.0
    %3042 = vmatprep.subr.mxu0 0.0
    %3043 = vmatpush1.msra.mxu0 0.0
    %3044 = vmatprep.subr.mxu0 0.0
    %3045 = vmatpush1.msra.mxu0 0.0
    %3046 = vmatprep.subr.mxu0 0.0
    %3047 = vmatpush1.msra.mxu0 0.0
    %3048 = vmatprep.subr.mxu0 0.0
    %3049 = vmatpush1.msra.mxu0 0.0
    %3050 = vmatprep.subr.mxu0 0.0
    %3051 = vmatpush1.msra.mxu0 0.0
    %3052 = vmatprep.mubr.f32.mxu0 0.0
    %v3053 = vand.u32 %v164, 4294901760
    %v3054 = vsub.f32 %v164, %v3053
    %v3055 = vand.u32 %v3054, 4294901760
    %3056 = vmatmul.mubr.f32.gmra.mrb[0].mxu0 %v3055
    %v3057 = vpop.f32.mrb[0].mxu0
    %v3058 = vadd.f32 %v2983, %v3057
    %v3059 = vpop.f32.mrb[0].mxu0
    %3060 = vdwg.mxu0
    %3061 = vmatprep.subr.mxu0 0.0
    %v3062 = vand.u32 %v113, 4294901760
    %v3063 = vsub.f32 %v113, %v3062
    %v3064 = vand.u32 %v3063, 4294901760
    %3065 = vmatpush1.msra.mxu0 %v3064
    %3066 = vmatprep.subr.mxu0 0.0
    %v3067 = vand.u32 %v114, 4294901760
    %v3068 = vsub.f32 %v114, %v3067
    %v3069 = vand.u32 %v3068, 4294901760
    %3070 = vmatpush1.msra.mxu0 %v3069
    %3071 = vmatprep.subr.mxu0 0.0
    %3072 = vmatpush1.msra.mxu0 0.0
    %3073 = vmatprep.subr.mxu0 0.0
    %3074 = vmatpush1.msra.mxu0 0.0
    %3075 = vmatprep.subr.mxu0 0.0
    %3076 = vmatpush1.msra.mxu0 0.0
    %3077 = vmatprep.subr.mxu0 0.0
    %3078 = vmatpush1.msra.mxu0 0.0
    %3079 = vmatprep.subr.mxu0 0.0
    %3080 = vmatpush1.msra.mxu0 0.0
    %3081 = vmatprep.subr.mxu0 0.0
    %3082 = vmatpush1.msra.mxu0 0.0
    %3083 = vmatprep.subr.mxu0 0.0
    %3084 = vmatpush1.msra.mxu0 0.0
    %3085 = vmatprep.subr.mxu0 0.0
    %3086 = vmatpush1.msra.mxu0 0.0
    %3087 = vmatprep.subr.mxu0 0.0
    %3088 = vmatpush1.msra.mxu0 0.0
    %3089 = vmatprep.subr.mxu0 0.0
    %3090 = vmatpush1.msra.mxu0 0.0
    %3091 = vmatprep.subr.mxu0 0.0
    %3092 = vmatpush1.msra.mxu0 0.0
    %3093 = vmatprep.subr.mxu0 0.0
    %3094 = vmatpush1.msra.mxu0 0.0
    %3095 = vmatprep.subr.mxu0 0.0
    %3096 = vmatpush1.msra.mxu0 0.0
    %3097 = vmatprep.subr.mxu0 0.0
    %3098 = vmatpush1.msra.mxu0 0.0
    %3099 = vmatprep.subr.mxu0 0.0
    %3100 = vmatpush1.msra.mxu0 0.0
    %3101 = vmatprep.subr.mxu0 0.0
    %3102 = vmatpush1.msra.mxu0 0.0
    %3103 = vmatprep.subr.mxu0 0.0
    %3104 = vmatpush1.msra.mxu0 0.0
    %3105 = vmatprep.subr.mxu0 0.0
    %3106 = vmatpush1.msra.mxu0 0.0
    %3107 = vmatprep.subr.mxu0 0.0
    %3108 = vmatpush1.msra.mxu0 0.0
    %3109 = vmatprep.subr.mxu0 0.0
    %3110 = vmatpush1.msra.mxu0 0.0
    %3111 = vmatprep.subr.mxu0 0.0
    %3112 = vmatpush1.msra.mxu0 0.0
    %3113 = vmatprep.subr.mxu0 0.0
    %3114 = vmatpush1.msra.mxu0 0.0
    %3115 = vmatprep.subr.mxu0 0.0
    %3116 = vmatpush1.msra.mxu0 0.0
    %3117 = vmatprep.subr.mxu0 0.0
    %3118 = vmatpush1.msra.mxu0 0.0
    %3119 = vmatprep.subr.mxu0 0.0
    %3120 = vmatpush1.msra.mxu0 0.0
    %3121 = vmatprep.subr.mxu0 0.0
    %3122 = vmatpush1.msra.mxu0 0.0
    %3123 = vmatprep.subr.mxu0 0.0
    %3124 = vmatpush1.msra.mxu0 0.0
    %3125 = vmatprep.subr.mxu0 0.0
    %3126 = vmatpush1.msra.mxu0 0.0
    %3127 = vmatprep.subr.mxu0 0.0
    %3128 = vmatpush1.msra.mxu0 0.0
    %3129 = vmatprep.subr.mxu0 0.0
    %3130 = vmatpush1.msra.mxu0 0.0
    %3131 = vmatprep.mubr.f32.mxu0 0.0
    %v3132 = vand.u32 %v164, 4294901760
    %3133 = vmatmul.mubr.f32.gmra.mrb[0].mxu0 %v3132
    %v3134 = vpop.f32.mrb[0].mxu0
    %v3135 = vadd.f32 %v3058, %v3134
    %v3136 = vpop.f32.mrb[0].mxu0
    %3137 = vdwg.mxu0
    %3138 = vmatprep.subr.mxu0 0.0
    %v3139 = vand.u32 %v113, 4294901760
    %3140 = vmatpush1.msra.mxu0 %v3139
    %3141 = vmatprep.subr.mxu0 0.0
    %v3142 = vand.u32 %v114, 4294901760
    %3143 = vmatpush1.msra.mxu0 %v3142
    %3144 = vmatprep.subr.mxu0 0.0
    %3145 = vmatpush1.msra.mxu0 0.0
    %3146 = vmatprep.subr.mxu0 0.0
    %3147 = vmatpush1.msra.mxu0 0.0
    %3148 = vmatprep.subr.mxu0 0.0
    %3149 = vmatpush1.msra.mxu0 0.0
    %3150 = vmatprep.subr.mxu0 0.0
    %3151 = vmatpush1.msra.mxu0 0.0
    %3152 = vmatprep.subr.mxu0 0.0
    %3153 = vmatpush1.msra.mxu0 0.0
    %3154 = vmatprep.subr.mxu0 0.0
    %3155 = vmatpush1.msra.mxu0 0.0
    %3156 = vmatprep.subr.mxu0 0.0
    %3157 = vmatpush1.msra.mxu0 0.0
    %3158 = vmatprep.subr.mxu0 0.0
    %3159 = vmatpush1.msra.mxu0 0.0
    %3160 = vmatprep.subr.mxu0 0.0
    %3161 = vmatpush1.msra.mxu0 0.0
    %3162 = vmatprep.subr.mxu0 0.0
    %3163 = vmatpush1.msra.mxu0 0.0
    %3164 = vmatprep.subr.mxu0 0.0
    %3165 = vmatpush1.msra.mxu0 0.0
    %3166 = vmatprep.subr.mxu0 0.0
    %3167 = vmatpush1.msra.mxu0 0.0
    %3168 = vmatprep.subr.mxu0 0.0
    %3169 = vmatpush1.msra.mxu0 0.0
    %3170 = vmatprep.subr.mxu0 0.0
    %3171 = vmatpush1.msra.mxu0 0.0
    %3172 = vmatprep.subr.mxu0 0.0
    %3173 = vmatpush1.msra.mxu0 0.0
    %3174 = vmatprep.subr.mxu0 0.0
    %3175 = vmatpush1.msra.mxu0 0.0
    %3176 = vmatprep.subr.mxu0 0.0
    %3177 = vmatpush1.msra.mxu0 0.0
    %3178 = vmatprep.subr.mxu0 0.0
    %3179 = vmatpush1.msra.mxu0 0.0
    %3180 = vmatprep.subr.mxu0 0.0
    %3181 = vmatpush1.msra.mxu0 0.0
    %3182 = vmatprep.subr.mxu0 0.0
    %3183 = vmatpush1.msra.mxu0 0.0
    %3184 = vmatprep.subr.mxu0 0.0
    %3185 = vmatpush1.msra.mxu0 0.0
    %3186 = vmatprep.subr.mxu0 0.0
    %3187 = vmatpush1.msra.mxu0 0.0
    %3188 = vmatprep.subr.mxu0 0.0
    %3189 = vmatpush1.msra.mxu0 0.0
    %3190 = vmatprep.subr.mxu0 0.0
    %3191 = vmatpush1.msra.mxu0 0.0
    %3192 = vmatprep.subr.mxu0 0.0
    %3193 = vmatpush1.msra.mxu0 0.0
    %3194 = vmatprep.subr.mxu0 0.0
    %3195 = vmatpush1.msra.mxu0 0.0
    %3196 = vmatprep.subr.mxu0 0.0
    %3197 = vmatpush1.msra.mxu0 0.0
    %3198 = vmatprep.subr.mxu0 0.0
    %3199 = vmatpush1.msra.mxu0 0.0
    %3200 = vmatprep.subr.mxu0 0.0
    %3201 = vmatpush1.msra.mxu0 0.0
    %3202 = vmatprep.subr.mxu0 0.0
    %3203 = vmatpush1.msra.mxu0 0.0
    %3204 = vmatprep.mubr.f32.mxu0 0.0
    %v3205 = vand.u32 %v164, 4294901760
    %3206 = vmatmul.mubr.f32.gmra.mrb[0].mxu0 %v3205
    %v3207 = vpop.f32.mrb[0].mxu0
    %v3208 = vadd.f32 %v3135, %v3207
    %v3209 = vpop.f32.mrb[0].mxu0
    %3210 = vdwg.mxu0
    %v3211 = vtanh.pop %v3208
    %vm3212 = vcmask 58368
    %3213 = vst.msk [vmem:[#allocation2] sm:$0x3] %vm3212, %v3211
    // Predicated region
    $region14: #{tpu_custom_call.1} parent=1 // pred_check
      _
    $region15: #{tpu_custom_call.1} parent=1 // pred_check_branch
      %3215 = sbr.rel (0) target = $region17
    $region16: #{tpu_custom_call.1} parent=1 // pred_region
      %s3217 = ssub.s32 32, 32
      %3218 = vsyncadd [#allocation3], %s3217
      %s3220 = sshll.u32 [#allocation2], 4
      %s3221 = int_to_ptr.vmem [resolvable:$true] %s3220
      %3223 = dma.vmem_to_hbm [thread:$0]  %s3221, 32, %s3, [#allocation3]
    $region17: #{tpu_custom_call.1} parent=1 // pred_fallthru
      _
    // Predicated region
    $region18: #{tpu_custom_call.1} parent=1 // pred_check
      _
    $region19: #{tpu_custom_call.1} parent=1 // pred_check_branch
      %3225 = sbr.rel (0) target = $region21
    $region20: #{tpu_custom_call.1} parent=1 // pred_region
      %3226 = dma.done [#allocation3], 32
    $region21: #{tpu_custom_call.1} parent=1 // pred_fallthru
      _
    %3227 = vsyncpa [#allocation3], 1

</llo_original>
